<compile_context>
chip_gen: v5e
topology: v5e:2x2
jax: 0.10.0
libtpu: 0.0.40
codegen_flags: <defaults>
</compile_context>

<pallas_src>
import functools
import math

import jax
import jax.numpy as jnp
from jax.experimental import pallas as pl
from jax.experimental.pallas import tpu as pltpu

LANES = 128  # pad kernel-output channel dims to this (lane-dense stores)


def _round_up(x, m):
    return (x + m - 1) // m * m


# ----------------------------------------------------------------------------
# Kernel 1: general stride-1 conv (+ folded-BN bias, optional ReLU).
#   Supports a channel-concat of several inputs folded in-kernel: per tap, the
#   contributions of each input are per-input weight K-slices summed into the
#   same f32 accumulator (no HBM concat copy).
#   The padded input is flattened to rows (one row per padded pixel).  For a
#   tap (kh, kw) the contribution to output row r is input row (r + tap_start)
#   with tap_start = kh*d*Wp + kw*d, so each tap is one shifted bf16 row-slice
#   of the ref and one (M, Cin) x (Cin, Cpad) MXU dot accumulated in f32.
#   Rows whose column lands in the right-hand "gutter" are garbage and sliced
#   off in glue.
# ----------------------------------------------------------------------------
def _conv_taps_kernel(*refs, n_in, tap_starts, m_rows, relu):
    x_refs = refs[:n_in]                       # each (1, R, Cin_i) bf16
    w_refs = refs[n_in:2 * n_in]               # each (T, Cin_i, Cpad) bf16
    b_ref = refs[2 * n_in]                     # (1, Cpad) f32
    o_ref = refs[2 * n_in + 1]                 # (1, m_rows, Cpad)

    def tap(t, start):
        # bf16 ref slices feed the MXU directly -- no f32 materialization.
        acc = jnp.dot(x_refs[0][0, pl.ds(start, m_rows), :], w_refs[0][t],
                      preferred_element_type=jnp.float32)
        for i in range(1, n_in):
            acc = acc + jnp.dot(x_refs[i][0, pl.ds(start, m_rows), :],
                                w_refs[i][t],
                                preferred_element_type=jnp.float32)
        return acc

    acc = tap(0, tap_starts[0])
    for t in range(1, len(tap_starts)):
        acc = acc + tap(t, tap_starts[t])
    acc = acc + b_ref[...]
    if relu:
        acc = jnp.maximum(acc, 0.0)
    o_ref[0] = acc.astype(o_ref.dtype)


def conv_bn_relu(xs, w, b, *, dilation=1, padding=0, relu=True,
                 out_dtype=jnp.bfloat16):
    """xs: (N,H,W,Cin) or list of such (channel-concat folded in-kernel);
    w: (KH,KW,sum(Cin_i),Cout); b: (Cout,). Stride-1 conv."""
    if not isinstance(xs, (list, tuple)):
        xs = [xs]
    xs = list(xs)
    N, H, W, _ = xs[0].shape
    cins = [t.shape[-1] for t in xs]
    KH, KW, Ctot, Cout = w.shape
    assert Ctot == sum(cins)
    d = dilation
    Hp = H + 2 * padding
    Wp = W + 2 * padding
    Ho = Hp - d * (KH - 1)
    Wo = Wp - d * (KW - 1)
    m_rows = Ho * Wp

    tap_starts = [kh * d * Wp + kw * d for kh in range(KH) for kw in range(KW)]
    rows_needed = max(tap_starts) + m_rows
    rows_total = _round_up(rows_needed, 8)

    # Glue (pure data movement): zero-pad spatially, flatten rows, pad rows.
    def prep(x):
        xp = jnp.pad(x, ((0, 0), (padding, padding), (padding, padding), (0, 0)))
        xf = xp.reshape(N, Hp * Wp, x.shape[-1])
        xf = jnp.pad(xf, ((0, 0), (0, rows_total - Hp * Wp), (0, 0)))
        return xf.astype(jnp.bfloat16)

    xfs = [prep(x) for x in xs]

    Cpad = _round_up(Cout, LANES)
    w_r = w.reshape(KH * KW, Ctot, Cout)
    w_r = jnp.pad(w_r, ((0, 0), (0, 0), (0, Cpad - Cout))).astype(jnp.bfloat16)
    w_splits, off = [], 0
    for c in cins:                                 # per-input K-slice of W
        w_splits.append(w_r[:, off:off + c, :])
        off += c
    bp = jnp.pad(b, (0, Cpad - Cout)).reshape(1, Cpad).astype(jnp.float32)

    n_in = len(xs)
    kern = functools.partial(_conv_taps_kernel, n_in=n_in,
                             tap_starts=tuple(tap_starts), m_rows=m_rows,
                             relu=relu)
    in_specs = (
        [pl.BlockSpec((1, rows_total, c), lambda n: (n, 0, 0)) for c in cins]
        + [pl.BlockSpec((KH * KW, c, Cpad), lambda n: (0, 0, 0)) for c in cins]
        + [pl.BlockSpec((1, Cpad), lambda n: (0, 0))]
    )
    out = pl.pallas_call(
        kern,
        out_shape=jax.ShapeDtypeStruct((N, m_rows, Cpad), out_dtype),
        grid=(N,),
        in_specs=in_specs,
        out_specs=pl.BlockSpec((1, m_rows, Cpad), lambda n: (n, 0, 0)),
        compiler_params=pltpu.CompilerParams(dimension_semantics=("parallel",)),
    )(*xfs, *w_splits, bp)
    # strip gutter columns and channel pad (glue)
    return out.reshape(N, Ho, Wp, Cpad)[:, :, :Wo, :Cout]


# ----------------------------------------------------------------------------
# Kernel 2: fused enc/dec tail
#   out = relu(concat(xa0,xa1,xa2) @ Wa + ba) + relu(xb @ Wb + bb)
#   (concat replaced by summing per-input K-slices of Wa).
#   For EncBlock, AvgPool2d(2,2) is fused as a f32 VPU reduction: the inputs
#   are flattened in pool-phase-major row order in glue, so the 2x2 window sum
#   is the sum of 4 CONTIGUOUS row-slices of the full-resolution result.
# ----------------------------------------------------------------------------
def _tail_body(x0, x1, x2, xb, wa, wb, ba, bb):
    acc_a = jnp.dot(x0[0], wa[0], preferred_element_type=jnp.float32)
    acc_a = acc_a + jnp.dot(x1[0], wa[1], preferred_element_type=jnp.float32)
    acc_a = acc_a + jnp.dot(x2[0], wa[2], preferred_element_type=jnp.float32)
    acc_a = acc_a + ba[...]
    acc_b = jnp.dot(xb[0], wb[...], preferred_element_type=jnp.float32) + bb[...]
    return jnp.maximum(acc_a, 0.0) + jnp.maximum(acc_b, 0.0)


def _tail_kernel(x0, x1, x2, xb, wa, wb, ba, bb, o_ref):
    o_ref[0] = _tail_body(x0, x1, x2, xb, wa, wb, ba, bb).astype(o_ref.dtype)


def _tail_pool_kernel(x0, x1, x2, xb, wa, wb, ba, bb, o_ref, *, q_rows):
    # rows are in pool-phase-major order: 4 planes of q_rows rows each; pooling
    # is 3 VPU adds + 1 scale, all in f32 (no MXU, no bf16 round-trip).
    out = _tail_body(x0, x1, x2, xb, wa, wb, ba, bb)     # (4*q_rows, Cpad) f32
    pooled = (out[0 * q_rows:1 * q_rows]
              + out[1 * q_rows:2 * q_rows]
              + out[2 * q_rows:3 * q_rows]
              + out[3 * q_rows:4 * q_rows]) * 0.25
    o_ref[0] = pooled.astype(o_ref.dtype)


def _flatten_pool_major(t):
    """(N,H,W,C) -> (N,H*W,C) with rows ordered (dy, dx, ph, pw), so the four
    2x2-pool phases are four contiguous blocks of H*W/4 rows."""
    N, H, W, C = t.shape
    t = t.reshape(N, H // 2, 2, W // 2, 2, C)
    t = jnp.transpose(t, (0, 2, 4, 1, 3, 5))             # (N, 2, 2, H/2, W/2, C)
    return t.reshape(N, H * W, C)


def fused_1x1_tail(xs_a, w_a, b_a, x_b, w_b, b_b, *, pool=False,
                   out_dtype=jnp.bfloat16):
    """xs_a: list of 3 (N,H,W,Ca); w_a: (1,1,3*Ca,Cout); x_b: (N,H,W,Cb)."""
    N, H, W, Ca = xs_a[0].shape
    Cb = x_b.shape[-1]
    KA = len(xs_a)
    Cout = b_a.shape[0]
    Cpad = _round_up(Cout, LANES)
    HW = H * W

    if pool:
        flat = _flatten_pool_major
    else:
        flat = lambda t: t.reshape(N, HW, t.shape[-1])
    xa = [flat(t).astype(jnp.bfloat16) for t in xs_a]
    xb = flat(x_b).astype(jnp.bfloat16)
    wa = jnp.pad(w_a.reshape(KA, Ca, Cout),
                 ((0, 0), (0, 0), (0, Cpad - Cout))).astype(jnp.bfloat16)
    wb = jnp.pad(w_b.reshape(Cb, Cout),
                 ((0, 0), (0, Cpad - Cout))).astype(jnp.bfloat16)
    ba = jnp.pad(b_a, (0, Cpad - Cout)).reshape(1, Cpad).astype(jnp.float32)
    bb = jnp.pad(b_b, (0, Cpad - Cout)).reshape(1, Cpad).astype(jnp.float32)

    in_specs = [
        pl.BlockSpec((1, HW, Ca), lambda n: (n, 0, 0)),
        pl.BlockSpec((1, HW, Ca), lambda n: (n, 0, 0)),
        pl.BlockSpec((1, HW, Ca), lambda n: (n, 0, 0)),
        pl.BlockSpec((1, HW, Cb), lambda n: (n, 0, 0)),
        pl.BlockSpec((KA, Ca, Cpad), lambda n: (0, 0, 0)),
        pl.BlockSpec((Cb, Cpad), lambda n: (0, 0)),
        pl.BlockSpec((1, Cpad), lambda n: (0, 0)),
        pl.BlockSpec((1, Cpad), lambda n: (0, 0)),
    ]
    args = xa + [xb, wa, wb, ba, bb]
    if pool:
        kern = functools.partial(_tail_pool_kernel, q_rows=HW // 4)
        m_out, Hn, Wn = HW // 4, H // 2, W // 2
    else:
        kern, m_out, Hn, Wn = _tail_kernel, HW, H, W

    out = pl.pallas_call(
        kern,
        out_shape=jax.ShapeDtypeStruct((N, m_out, Cpad), out_dtype),
        grid=(N,),
        in_specs=in_specs,
        out_specs=pl.BlockSpec((1, m_out, Cpad), lambda n: (n, 0, 0)),
        compiler_params=pltpu.CompilerParams(dimension_semantics=("parallel",)),
    )(*args)
    return out.reshape(N, Hn, Wn, Cpad)[..., :Cout]


# ----------------------------------------------------------------------------
# Kernel 3: ConvTranspose2d(3,3, stride=2, padding=1, output_padding=1)+BN+ReLU
#   via 4-phase (sub-pixel) decomposition computed in ONE kernel; phases are
#   interleaved into the 2x-resolution output in glue.
# ----------------------------------------------------------------------------
# taps per output-parity phase: (dy, dx, kh, kw); out[2t+pr, 2u+pc] +=
#   x[t+dy, u+dx] @ W[kh, kw]   (W in (KH,KW,Cin,Cout) layout).
# TODO(synk): for a real PyTorch checkpoint, weight layout (Cin,Cout,KH,KW)
# must be permuted to (KH,KW,Cin,Cout) before this routine (no spatial flip
# needed given the tap table below).
_PHASE_TAPS = (
    ((0, 0, 1, 1),),
    ((0, 0, 1, 2), (0, 1, 1, 0)),
    ((0, 0, 2, 1), (1, 0, 0, 1)),
    ((0, 0, 2, 2), (0, 1, 2, 0), (1, 0, 0, 2), (1, 1, 0, 0)),
)


def _transconv_kernel(x_ref, w_ref, b_ref, o_ref, *, phase_starts, m_rows):
    bias = b_ref[...]
    for p_idx, taps in enumerate(phase_starts):
        t0, s0 = taps[0]
        acc = jnp.dot(x_ref[0, pl.ds(s0, m_rows), :], w_ref[t0],
                      preferred_element_type=jnp.float32)
        for t, s in taps[1:]:
            acc = acc + jnp.dot(x_ref[0, pl.ds(s, m_rows), :], w_ref[t],
                                preferred_element_type=jnp.float32)
        acc = jnp.maximum(acc + bias, 0.0)
        o_ref[0, p_idx] = acc.astype(o_ref.dtype)


def conv_transpose_bn_relu(x, w, b, *, out_dtype=jnp.bfloat16):
    """x: (N,H,W,Cin); w: (3,3,Cin,Cout); b: (Cout,). Output: (N,2H,2W,Cout)."""
    N, H, W, Cin = x.shape
    Cout = w.shape[-1]
    Cpad = _round_up(Cout, LANES)
    Hp, Wp = H + 1, W + 1          # one zero row/col of bottom/right padding
    m_rows = H * Wp

    taps = [t for ph in _PHASE_TAPS for t in ph]
    w_taps = jnp.stack([w[kh, kw] for (_, _, kh, kw) in taps], axis=0)
    w_taps = jnp.pad(w_taps, ((0, 0), (0, 0), (0, Cpad - Cout))).astype(jnp.bfloat16)
    bp = jnp.pad(b, (0, Cpad - Cout)).reshape(1, Cpad).astype(jnp.float32)

    phase_starts, ti = [], 0
    for ph in _PHASE_TAPS:
        lst = []
        for (dy, dx, _, _) in ph:
            lst.append((ti, dy * Wp + dx))
            ti += 1
        phase_starts.append(tuple(lst))

    rows_needed = Wp + 1 + m_rows
    rows_total = _round_up(rows_needed, 8)
    xp = jnp.pad(x, ((0, 0), (0, 1), (0, 1), (0, 0)))
    xf = xp.reshape(N, Hp * Wp, Cin)
    xf = jnp.pad(xf, ((0, 0), (0, rows_total - Hp * Wp), (0, 0))).astype(jnp.bfloat16)

    kern = functools.partial(_transconv_kernel, phase_starts=tuple(phase_starts),
                             m_rows=m_rows)
    out = pl.pallas_call(
        kern,
        out_shape=jax.ShapeDtypeStruct((N, 4, m_rows, Cpad), out_dtype),
        grid=(N,),
        in_specs=[
            pl.BlockSpec((1, rows_total, Cin), lambda n: (n, 0, 0)),
            pl.BlockSpec((len(taps), Cin, Cpad), lambda n: (0, 0, 0)),
            pl.BlockSpec((1, Cpad), lambda n: (0, 0)),
        ],
        out_specs=pl.BlockSpec((1, 4, m_rows, Cpad), lambda n: (n, 0, 0, 0)),
        compiler_params=pltpu.CompilerParams(dimension_semantics=("parallel",)),
    )(xf, w_taps, bp)

    # Glue: drop gutter/channel pad and interleave the 4 parity phases.
    # TODO(synk): the phase interleave could be folded into the consuming
    # dec conv1 / tail (per-phase tap_starts) to save one HBM pass per dec.
    ph = out.reshape(N, 4, H, Wp, Cpad)[:, :, :, :W, :Cout]
    ph = ph.reshape(N, 2, 2, H, W, Cout)
    ph = jnp.transpose(ph, (0, 3, 1, 4, 2, 5))      # (N, H, 2, W, 2, C)
    return ph.reshape(N, 2 * H, 2 * W, Cout)


# ----------------------------------------------------------------------------
# Parameter construction (deterministic, synthetic; BN folded, inference mode)
# ----------------------------------------------------------------------------
class KeyGen:
    def __init__(self, key):
        self.key = key

    def __call__(self):
        self.key, sub = jax.random.split(self.key)
        return sub


def make_conv_bn(kg, cin, cout, kh, kw):
    std = math.sqrt(2.0 / (kh * kw * cin))
    w = jax.random.normal(kg(), (kh, kw, cin, cout), jnp.float32) * std
    b = 0.1 * jax.random.normal(kg(), (cout,), jnp.float32)
    gamma = 1.0 + 0.1 * jax.random.normal(kg(), (cout,), jnp.float32)
    beta = 0.1 * jax.random.normal(kg(), (cout,), jnp.float32)
    mean = 0.05 * jax.random.normal(kg(), (cout,), jnp.float32)
    var = 1.0 + 0.1 * jnp.abs(jax.random.normal(kg(), (cout,), jnp.float32))
    scale = gamma / jnp.sqrt(var + 1e-5)
    return {'w': w * scale, 'b': scale * (b - mean) + beta}


def make_conv(kg, cin, cout, kh, kw):
    std = math.sqrt(2.0 / (kh * kw * cin))
    w = jax.random.normal(kg(), (kh, kw, cin, cout), jnp.float32) * std
    b = 0.1 * jax.random.normal(kg(), (cout,), jnp.float32)
    return {'w': w, 'b': b}


def build_cp_unet_params(key, input_channels, layers_num, output_channels):
    kg = KeyGen(key)
    layers = [int(input_channels * 2 ** i) for i in range(layers_num)]
    p = {
        'pre_conv': {
            'conv1': make_conv_bn(kg, input_channels, input_channels, 3, 3),
            'conv2': make_conv_bn(kg, input_channels, input_channels, 3, 3),
        },
        'out_conv': make_conv(kg, input_channels, output_channels, 1, 1),
        'enc': [], 'dec': [], 'basic': [],
    }
    for i in range(layers_num - 1):
        cin = layers[i]
        cout = 2 * cin
        p['enc'].append({
            'conv1': make_conv_bn(kg, cin, cin, 3, 3),
            'conv2': make_conv_bn(kg, cin, cin, 3, 3),
            'conv3': make_conv_bn(kg, cin, cin, 2, 2),
            'conv4': make_conv_bn(kg, 3 * cin, cout, 1, 1),
            'conv5': make_conv_bn(kg, cin, cout, 1, 1),
        })
        dcin = layers[-1 - i]
        dcout = dcin // 2
        p['dec'].append({
            'transconv': make_conv_bn(kg, dcin, dcout, 3, 3),
            'conv1': make_conv_bn(kg, dcout, dcout, 3, 3),
            'conv2': make_conv_bn(kg, dcout, dcout, 3, 3),
            'conv3': make_conv_bn(kg, dcout, dcout, 2, 2),
            'conv4': make_conv_bn(kg, 3 * dcout, dcout, 1, 1),
            'conv5': make_conv_bn(kg, dcout, dcout, 1, 1),
        })
        p['basic'].append({
            'conv1': make_conv_bn(kg, layers[-1 - i], layers[-2 - i], 3, 3),
            'conv2': make_conv_bn(kg, layers[-2 - i], layers[-2 - i], 3, 3),
        })
    return p


# ----------------------------------------------------------------------------
# Module forwards
# ----------------------------------------------------------------------------
def basic_block(p, x):
    # NOTE: reference BasicBlock.forward has NO residual add.
    # x may be a list -> channel-concat folded into conv1 (no HBM concat copy).
    h = conv_bn_relu(x, p['conv1']['w'], p['conv1']['b'], dilation=1, padding=1)
    h = conv_bn_relu(h, p['conv2']['w'], p['conv2']['b'], dilation=1, padding=1)
    return h


def enc_block(p, x):
    o1 = conv_bn_relu(x, p['conv1']['w'], p['conv1']['b'], dilation=1, padding=1)
    o2 = conv_bn_relu(o1, p['conv2']['w'], p['conv2']['b'], dilation=2, padding=2)
    o3 = conv_bn_relu(o2, p['conv3']['w'], p['conv3']['b'], dilation=2, padding=1)
    # fused: concat + conv4 + conv5 + add + AvgPool2d(2,2) (in-kernel VPU pool)
    return fused_1x1_tail([o1, o2, o3], p['conv4']['w'], p['conv4']['b'],
                          x, p['conv5']['w'], p['conv5']['b'], pool=True)


def dec_block(p, x):
    o1 = conv_transpose_bn_relu(x, p['transconv']['w'], p['transconv']['b'])
    o2 = conv_bn_relu(o1, p['conv1']['w'], p['conv1']['b'], dilation=1, padding=1)
    o3 = conv_bn_relu(o2, p['conv2']['w'], p['conv2']['b'], dilation=2, padding=2)
    o4 = conv_bn_relu(o3, p['conv3']['w'], p['conv3']['b'], dilation=2, padding=1)
    # fused: concat + conv4 + conv5 + add (no pool in DecBlock)
    return fused_1x1_tail([o2, o3, o4], p['conv4']['w'], p['conv4']['b'],
                          o1, p['conv5']['w'], p['conv5']['b'], pool=False)


def cp_unet_forward(params, x_nhwc):
    e0 = basic_block(params['pre_conv'], x_nhwc)
    e1 = enc_block(params['enc'][0], e0)
    e2 = enc_block(params['enc'][1], e1)
    e3 = enc_block(params['enc'][2], e2)

    # skip-connection concats folded into the basic-block conv1 (no HBM concat)
    d0 = dec_block(params['dec'][0], e3)
    d0 = basic_block(params['basic'][0], [e2, d0])

    d1 = dec_block(params['dec'][1], d0)
    d1 = basic_block(params['basic'][1], [e1, d1])

    d2 = dec_block(params['dec'][2], d1)
    d2 = basic_block(params['basic'][2], [e0, d2])

    out = conv_bn_relu(d2, params['out_conv']['w'], params['out_conv']['b'],
                       dilation=1, padding=0, relu=False, out_dtype=jnp.float32)
    out_dict = {'e1': e1, 'e2': e2, 'e3': e3, 'd0': d0}
    return out, out_dict


# ----------------------------------------------------------------------------
# Pure-JAX references for self-checking the nontrivial kernels
# ----------------------------------------------------------------------------
def _ref_conv(x, w, b, dilation, padding, relu=True):
    xb = x.astype(jnp.bfloat16).astype(jnp.float32)
    wb = w.astype(jnp.bfloat16).astype(jnp.float32)
    N, H, W, _ = x.shape
    KH, KW, _, Co = w.shape
    d = dilation
    xp = jnp.pad(xb, ((0, 0), (padding, padding), (padding, padding), (0, 0)))
    Ho = H + 2 * padding - d * (KH - 1)
    Wo = W + 2 * padding - d * (KW - 1)
    out = jnp.zeros((N, Ho, Wo, Co), jnp.float32) + b
    for kh in range(KH):
        for kw in range(KW):
            out = out + jnp.einsum('nhwc,co->nhwo',
                                   xp[:, kh * d:kh * d + Ho, kw * d:kw * d + Wo, :],
                                   wb[kh, kw])
    return jnp.maximum(out, 0.0) if relu else out


def _ref_transconv(x, w, b):
    xb = x.astype(jnp.bfloat16).astype(jnp.float32)
    wb = w.astype(jnp.bfloat16).astype(jnp.float32)
    N, H, W, _ = x.shape
    Co = w.shape[-1]
    out = jnp.zeros((N, 2 * H + 2, 2 * W + 2, Co), jnp.float32)
    for kh in range(3):
        for kw in range(3):
            contrib = jnp.einsum('nhwc,co->nhwo', xb, wb[kh, kw])
            out = out.at[:, kh:kh + 2 * H:2, kw:kw + 2 * W:2, :].add(contrib)
    out = out[:, 1:2 * H + 1, 1:2 * W + 1, :] + b
    return jnp.maximum(out, 0.0)


def _ref_tail(xs_a, w_a, b_a, x_b, w_b, b_b, pool):
    f = lambda t: t.astype(jnp.bfloat16).astype(jnp.float32)
    xa = jnp.concatenate([f(t) for t in xs_a], axis=-1)
    wa = f(w_a[0, 0])
    wb = f(w_b[0, 0])
    a = jnp.maximum(jnp.einsum('nhwc,co->nhwo', xa, wa) + b_a, 0.0)
    bq = jnp.maximum(jnp.einsum('nhwc,co->nhwo', f(x_b), wb) + b_b, 0.0)
    out = a + bq
    if pool:
        N, H, W, C = out.shape
        out = out.reshape(N, H // 2, 2, W // 2, 2, C).mean(axis=(2, 4))
    return out


# ----------------------------------------------------------------------------
if __name__ == "__main__":
    key = jax.random.PRNGKey(0)
    kp, kx, k1, k2, k3, k4, k5, k6, k7, k8 = jax.random.split(key, 10)

    # --- self-check: tap-accumulation conv (dilated) --------------------------
    xs = jax.random.normal(k1, (2, 8, 8, 4), jnp.float32)
    ws = jax.random.normal(k2, (3, 3, 4, 4), jnp.float32) * 0.2
    bs = 0.1 * jax.random.normal(k3, (4,), jnp.float32)
    got = conv_bn_relu(xs, ws, bs, dilation=2, padding=2).astype(jnp.float32)
    want = _ref_conv(xs, ws, bs, 2, 2)
    assert bool(jnp.allclose(got, want, atol=0.1, rtol=0.05)), \
        float(jnp.max(jnp.abs(got - want)))

    # --- self-check: concat-folded 2-input conv --------------------------------
    xs2 = jax.random.normal(k4, (2, 8, 8, 4), jnp.float32)
    wcat = jax.random.normal(k5, (3, 3, 8, 4), jnp.float32) * 0.2
    got2 = conv_bn_relu([xs, xs2], wcat, bs, dilation=1, padding=1).astype(jnp.float32)
    want2 = _ref_conv(jnp.concatenate([xs, xs2], axis=-1), wcat, bs, 1, 1)
    assert bool(jnp.allclose(got2, want2, atol=0.1, rtol=0.05)), \
        float(jnp.max(jnp.abs(got2 - want2)))

    # --- self-check: 4-phase transposed conv -----------------------------------
    wt = jax.random.normal(k6, (3, 3, 4, 4), jnp.float32) * 0.2
    got_t = conv_transpose_bn_relu(xs, wt, bs).astype(jnp.float32)
    want_t = _ref_transconv(xs, wt, bs)
    assert bool(jnp.allclose(got_t, want_t, atol=0.1, rtol=0.05)), \
        float(jnp.max(jnp.abs(got_t - want_t)))

    # --- self-check: fused concat/1x1/add tail with in-kernel avg-pool ---------
    xa_list = [jax.random.normal(jax.random.fold_in(k7, i), (2, 8, 8, 4),
                                 jnp.float32) for i in range(3)]
    x_b = jax.random.normal(jax.random.fold_in(k7, 3), (2, 8, 8, 4), jnp.float32)
    w_a = jax.random.normal(jax.random.fold_in(k8, 0), (1, 1, 12, 8), jnp.float32) * 0.2
    w_b = jax.random.normal(jax.random.fold_in(k8, 1), (1, 1, 4, 8), jnp.float32) * 0.2
    b_a = 0.1 * jax.random.normal(jax.random.fold_in(k8, 2), (8,), jnp.float32)
    b_b = 0.1 * jax.random.normal(jax.random.fold_in(k8, 3), (8,), jnp.float32)
    got_p = fused_1x1_tail(xa_list, w_a, b_a, x_b, w_b, b_b, pool=True).astype(jnp.float32)
    want_p = _ref_tail(xa_list, w_a, b_a, x_b, w_b, b_b, pool=True)
    assert bool(jnp.allclose(got_p, want_p, atol=0.1, rtol=0.05)), \
        float(jnp.max(jnp.abs(got_p - want_p)))

    # --- full CP_Unet forward ---------------------------------------------------
    C_IN, LAYERS_NUM, C_OUT = 4, 4, 8
    N, H, W = 2, 16, 16

    params = build_cp_unet_params(kp, C_IN, LAYERS_NUM, C_OUT)
    x_nchw = jax.random.normal(kx, (N, C_IN, H, W), jnp.float32)
    x_nhwc = jnp.transpose(x_nchw, (0, 2, 3, 1))

    fwd = jax.jit(cp_unet_forward)
    out_nhwc, out_dict = fwd(params, x_nhwc)
    out_nchw = jnp.transpose(out_nhwc, (0, 3, 1, 2))   # back to PyTorch NCHW

    jax.block_until_ready(out_nchw)
    for v in out_dict.values():
        jax.block_until_ready(v)

    assert out_nchw.shape == (N, C_OUT, H, W), out_nchw.shape
    assert out_dict['e1'].shape == (N, H // 2, W // 2, 2 * C_IN)
    assert out_dict['e2'].shape == (N, H // 4, W // 4, 4 * C_IN)
    assert out_dict['e3'].shape == (N, H // 8, W // 8, 8 * C_IN)
    assert out_dict['d0'].shape == (N, H // 4, W // 4, 4 * C_IN)
    assert bool(jnp.all(jnp.isfinite(out_nchw)))
    print("KERNEL_OK")
</pallas_src>

<mosaic_0001>
module attributes {stable_mosaic.version = 11 : i64} {
  func.func @_conv_taps_kernel(%arg0: i32, %arg1: memref<1x152x4xbf16, #tpu.memory_space<vmem>>, %arg2: memref<9x4x128xbf16, #tpu.memory_space<vmem>>, %arg3: memref<1x128xf32, #tpu.memory_space<vmem>>, %arg4: memref<1x96x128xbf16, #tpu.memory_space<vmem>>) attributes {dimension_semantics = [#tpu.dimension_semantics<parallel>], iteration_bounds = array<i64: 2>, scalar_prefetch = 0 : i64, scratch_operands = 0 : i64, tpu.core_type = #tpu.core_type<tc>, window_params = [{transform_indices = @transform_0, window_bounds = array<i64: 1, 152, 4>}, {pipeline_mode = #tpu.pipeline_mode<synchronous>, transform_indices = @transform_1, window_bounds = array<i64: 9, 4, 128>}, {pipeline_mode = #tpu.pipeline_mode<synchronous>, transform_indices = @transform_2, window_bounds = array<i64: 1, 128>}, {transform_indices = @transform_3, window_bounds = array<i64: 1, 96, 128>}]} {
    %c0 = arith.constant 0 : index
    %c0_0 = arith.constant 0 : index
    %c0_1 = arith.constant 0 : index
    %0 = vector.load %arg1[%c0, %c0_0, %c0_1] : memref<1x152x4xbf16, #tpu.memory_space<vmem>>, vector<1x96x4xbf16>
    %1 = vector.shape_cast %0 : vector<1x96x4xbf16> to vector<96x4xbf16>
    %c0_2 = arith.constant 0 : index
    %c0_3 = arith.constant 0 : index
    %c0_4 = arith.constant 0 : index
    %2 = vector.load %arg2[%c0_2, %c0_3, %c0_4] : memref<9x4x128xbf16, #tpu.memory_space<vmem>>, vector<1x4x128xbf16>
    %3 = vector.shape_cast %2 : vector<1x4x128xbf16> to vector<4x128xbf16>
    %cst = arith.constant dense<0.000000e+00> : vector<96x128xf32>
    %4 = tpu.matmul %1, %3, %cst {dimension_numbers = #tpu.dot_dimension_numbers<[1], [0], [0], [1], [0, 0, 1, 1], [], []>} : vector<96x4xbf16>, vector<4x128xbf16>, vector<96x128xf32> -> vector<96x128xf32>
    %c0_5 = arith.constant 0 : index
    %c2 = arith.constant 2 : index
    %c0_6 = arith.constant 0 : index
    %5 = vector.load %arg1[%c0_5, %c2, %c0_6] : memref<1x152x4xbf16, #tpu.memory_space<vmem>>, vector<1x96x4xbf16>
    %6 = vector.shape_cast %5 : vector<1x96x4xbf16> to vector<96x4xbf16>
    %c1 = arith.constant 1 : index
    %c0_7 = arith.constant 0 : index
    %c0_8 = arith.constant 0 : index
    %7 = vector.load %arg2[%c1, %c0_7, %c0_8] : memref<9x4x128xbf16, #tpu.memory_space<vmem>>, vector<1x4x128xbf16>
    %8 = vector.shape_cast %7 : vector<1x4x128xbf16> to vector<4x128xbf16>
    %cst_9 = arith.constant dense<0.000000e+00> : vector<96x128xf32>
    %9 = tpu.matmul %6, %8, %cst_9 {dimension_numbers = #tpu.dot_dimension_numbers<[1], [0], [0], [1], [0, 0, 1, 1], [], []>} : vector<96x4xbf16>, vector<4x128xbf16>, vector<96x128xf32> -> vector<96x128xf32>
    %10 = arith.addf %4, %9 : vector<96x128xf32>
    %c0_10 = arith.constant 0 : index
    %c4 = arith.constant 4 : index
    %c0_11 = arith.constant 0 : index
    %11 = vector.load %arg1[%c0_10, %c4, %c0_11] : memref<1x152x4xbf16, #tpu.memory_space<vmem>>, vector<1x96x4xbf16>
    %12 = vector.shape_cast %11 : vector<1x96x4xbf16> to vector<96x4xbf16>
    %c2_12 = arith.constant 2 : index
    %c0_13 = arith.constant 0 : index
    %c0_14 = arith.constant 0 : index
    %13 = vector.load %arg2[%c2_12, %c0_13, %c0_14] : memref<9x4x128xbf16, #tpu.memory_space<vmem>>, vector<1x4x128xbf16>
    %14 = vector.shape_cast %13 : vector<1x4x128xbf16> to vector<4x128xbf16>
    %cst_15 = arith.constant dense<0.000000e+00> : vector<96x128xf32>
    %15 = tpu.matmul %12, %14, %cst_15 {dimension_numbers = #tpu.dot_dimension_numbers<[1], [0], [0], [1], [0, 0, 1, 1], [], []>} : vector<96x4xbf16>, vector<4x128xbf16>, vector<96x128xf32> -> vector<96x128xf32>
    %16 = arith.addf %10, %15 : vector<96x128xf32>
    %c0_16 = arith.constant 0 : index
    %c24 = arith.constant 24 : index
    %c0_17 = arith.constant 0 : index
    %17 = vector.load %arg1[%c0_16, %c24, %c0_17] : memref<1x152x4xbf16, #tpu.memory_space<vmem>>, vector<1x96x4xbf16>
    %18 = vector.shape_cast %17 : vector<1x96x4xbf16> to vector<96x4xbf16>
    %c3 = arith.constant 3 : index
    %c0_18 = arith.constant 0 : index
    %c0_19 = arith.constant 0 : index
    %19 = vector.load %arg2[%c3, %c0_18, %c0_19] : memref<9x4x128xbf16, #tpu.memory_space<vmem>>, vector<1x4x128xbf16>
    %20 = vector.shape_cast %19 : vector<1x4x128xbf16> to vector<4x128xbf16>
    %cst_20 = arith.constant dense<0.000000e+00> : vector<96x128xf32>
    %21 = tpu.matmul %18, %20, %cst_20 {dimension_numbers = #tpu.dot_dimension_numbers<[1], [0], [0], [1], [0, 0, 1, 1], [], []>} : vector<96x4xbf16>, vector<4x128xbf16>, vector<96x128xf32> -> vector<96x128xf32>
    %22 = arith.addf %16, %21 : vector<96x128xf32>
    %c0_21 = arith.constant 0 : index
    %c26 = arith.constant 26 : index
    %c0_22 = arith.constant 0 : index
    %23 = vector.load %arg1[%c0_21, %c26, %c0_22] : memref<1x152x4xbf16, #tpu.memory_space<vmem>>, vector<1x96x4xbf16>
    %24 = vector.shape_cast %23 : vector<1x96x4xbf16> to vector<96x4xbf16>
    %c4_23 = arith.constant 4 : index
    %c0_24 = arith.constant 0 : index
    %c0_25 = arith.constant 0 : index
    %25 = vector.load %arg2[%c4_23, %c0_24, %c0_25] : memref<9x4x128xbf16, #tpu.memory_space<vmem>>, vector<1x4x128xbf16>
    %26 = vector.shape_cast %25 : vector<1x4x128xbf16> to vector<4x128xbf16>
    %cst_26 = arith.constant dense<0.000000e+00> : vector<96x128xf32>
    %27 = tpu.matmul %24, %26, %cst_26 {dimension_numbers = #tpu.dot_dimension_numbers<[1], [0], [0], [1], [0, 0, 1, 1], [], []>} : vector<96x4xbf16>, vector<4x128xbf16>, vector<96x128xf32> -> vector<96x128xf32>
    %28 = arith.addf %22, %27 : vector<96x128xf32>
    %c0_27 = arith.constant 0 : index
    %c28 = arith.constant 28 : index
    %c0_28 = arith.constant 0 : index
    %29 = vector.load %arg1[%c0_27, %c28, %c0_28] : memref<1x152x4xbf16, #tpu.memory_space<vmem>>, vector<1x96x4xbf16>
    %30 = vector.shape_cast %29 : vector<1x96x4xbf16> to vector<96x4xbf16>
    %c5 = arith.constant 5 : index
    %c0_29 = arith.constant 0 : index
    %c0_30 = arith.constant 0 : index
    %31 = vector.load %arg2[%c5, %c0_29, %c0_30] : memref<9x4x128xbf16, #tpu.memory_space<vmem>>, vector<1x4x128xbf16>
    %32 = vector.shape_cast %31 : vector<1x4x128xbf16> to vector<4x128xbf16>
    %cst_31 = arith.constant dense<0.000000e+00> : vector<96x128xf32>
    %33 = tpu.matmul %30, %32, %cst_31 {dimension_numbers = #tpu.dot_dimension_numbers<[1], [0], [0], [1], [0, 0, 1, 1], [], []>} : vector<96x4xbf16>, vector<4x128xbf16>, vector<96x128xf32> -> vector<96x128xf32>
    %34 = arith.addf %28, %33 : vector<96x128xf32>
    %c0_32 = arith.constant 0 : index
    %c48 = arith.constant 48 : index
    %c0_33 = arith.constant 0 : index
    %35 = vector.load %arg1[%c0_32, %c48, %c0_33] : memref<1x152x4xbf16, #tpu.memory_space<vmem>>, vector<1x96x4xbf16>
    %36 = vector.shape_cast %35 : vector<1x96x4xbf16> to vector<96x4xbf16>
    %c6 = arith.constant 6 : index
    %c0_34 = arith.constant 0 : index
    %c0_35 = arith.constant 0 : index
    %37 = vector.load %arg2[%c6, %c0_34, %c0_35] : memref<9x4x128xbf16, #tpu.memory_space<vmem>>, vector<1x4x128xbf16>
    %38 = vector.shape_cast %37 : vector<1x4x128xbf16> to vector<4x128xbf16>
    %cst_36 = arith.constant dense<0.000000e+00> : vector<96x128xf32>
    %39 = tpu.matmul %36, %38, %cst_36 {dimension_numbers = #tpu.dot_dimension_numbers<[1], [0], [0], [1], [0, 0, 1, 1], [], []>} : vector<96x4xbf16>, vector<4x128xbf16>, vector<96x128xf32> -> vector<96x128xf32>
    %40 = arith.addf %34, %39 : vector<96x128xf32>
    %c0_37 = arith.constant 0 : index
    %c50 = arith.constant 50 : index
    %c0_38 = arith.constant 0 : index
    %41 = vector.load %arg1[%c0_37, %c50, %c0_38] : memref<1x152x4xbf16, #tpu.memory_space<vmem>>, vector<1x96x4xbf16>
    %42 = vector.shape_cast %41 : vector<1x96x4xbf16> to vector<96x4xbf16>
    %c7 = arith.constant 7 : index
    %c0_39 = arith.constant 0 : index
    %c0_40 = arith.constant 0 : index
    %43 = vector.load %arg2[%c7, %c0_39, %c0_40] : memref<9x4x128xbf16, #tpu.memory_space<vmem>>, vector<1x4x128xbf16>
    %44 = vector.shape_cast %43 : vector<1x4x128xbf16> to vector<4x128xbf16>
    %cst_41 = arith.constant dense<0.000000e+00> : vector<96x128xf32>
    %45 = tpu.matmul %42, %44, %cst_41 {dimension_numbers = #tpu.dot_dimension_numbers<[1], [0], [0], [1], [0, 0, 1, 1], [], []>} : vector<96x4xbf16>, vector<4x128xbf16>, vector<96x128xf32> -> vector<96x128xf32>
    %46 = arith.addf %40, %45 : vector<96x128xf32>
    %c0_42 = arith.constant 0 : index
    %c52 = arith.constant 52 : index
    %c0_43 = arith.constant 0 : index
    %47 = vector.load %arg1[%c0_42, %c52, %c0_43] : memref<1x152x4xbf16, #tpu.memory_space<vmem>>, vector<1x96x4xbf16>
    %48 = vector.shape_cast %47 : vector<1x96x4xbf16> to vector<96x4xbf16>
    %c8 = arith.constant 8 : index
    %c0_44 = arith.constant 0 : index
    %c0_45 = arith.constant 0 : index
    %49 = vector.load %arg2[%c8, %c0_44, %c0_45] : memref<9x4x128xbf16, #tpu.memory_space<vmem>>, vector<1x4x128xbf16>
    %50 = vector.shape_cast %49 : vector<1x4x128xbf16> to vector<4x128xbf16>
    %cst_46 = arith.constant dense<0.000000e+00> : vector<96x128xf32>
    %51 = tpu.matmul %48, %50, %cst_46 {dimension_numbers = #tpu.dot_dimension_numbers<[1], [0], [0], [1], [0, 0, 1, 1], [], []>} : vector<96x4xbf16>, vector<4x128xbf16>, vector<96x128xf32> -> vector<96x128xf32>
    %52 = arith.addf %46, %51 : vector<96x128xf32>
    %c0_47 = arith.constant 0 : index
    %c0_48 = arith.constant 0 : index
    %53 = vector.load %arg3[%c0_47, %c0_48] : memref<1x128xf32, #tpu.memory_space<vmem>>, vector<1x128xf32>
    %54 = vector.broadcast %53 : vector<1x128xf32> to vector<96x128xf32>
    %55 = arith.addf %52, %54 : vector<96x128xf32>
    %cst_49 = arith.constant 0.000000e+00 : f32
    %56 = vector.broadcast %cst_49 : f32 to vector<96x128xf32>
    %57 = arith.maximumf %55, %56 : vector<96x128xf32>
    %58 = arith.truncf %57 : vector<96x128xf32> to vector<96x128xbf16>
    %c0_50 = arith.constant 0 : index
    %c0_51 = arith.constant 0 : index
    %c0_52 = arith.constant 0 : index
    %59 = vector.load %arg4[%c0_50, %c0_51, %c0_52] : memref<1x96x128xbf16, #tpu.memory_space<vmem>>, vector<1x96x128xbf16>
    %60 = vector.shape_cast %59 : vector<1x96x128xbf16> to vector<96x128xbf16>
    %61 = vector.shape_cast %58 : vector<96x128xbf16> to vector<1x96x128xbf16>
    tpu.vector_store %arg4[%c0_50, %c0_51, %c0_52], %61 {strides = array<i32>} : memref<1x96x128xbf16, #tpu.memory_space<vmem>>, vector<1x96x128xbf16>,
    return
  }
  func.func @transform_0(%arg0: i32) -> (i32, i32, i32) {
    %c0_i32 = arith.constant 0 : i32
    %c0_i32_0 = arith.constant 0 : i32
    %c0_i32_1 = arith.constant 0 : i32
    return %arg0, %c0_i32, %c0_i32_0 : i32, i32, i32
  }
  func.func @transform_1(%arg0: i32) -> (i32, i32, i32) {
    %c0_i32 = arith.constant 0 : i32
    %c0_i32_0 = arith.constant 0 : i32
    %c0_i32_1 = arith.constant 0 : i32
    %c0_i32_2 = arith.constant 0 : i32
    return %c0_i32, %c0_i32_0, %c0_i32_1 : i32, i32, i32
  }
  func.func @transform_2(%arg0: i32) -> (i32, i32) {
    %c0_i32 = arith.constant 0 : i32
    %c0_i32_0 = arith.constant 0 : i32
    %c0_i32_1 = arith.constant 0 : i32
    return %c0_i32, %c0_i32_0 : i32, i32
  }
  func.func @transform_3(%arg0: i32) -> (i32, i32, i32) {
    %c0_i32 = arith.constant 0 : i32
    %c0_i32_0 = arith.constant 0 : i32
    %c0_i32_1 = arith.constant 0 : i32
    return %arg0, %c0_i32, %c0_i32_0 : i32, i32, i32
  }
}

</mosaic_0001>

<llo_original>
// kernel: tpu_custom_call.1
$region0: #{tpu_custom_call.1}
  #allocation0 [shape = 'u32[]', space=smem, size = 0x4, offset = 0x4, fixed_abs, tag = 'smem constant byte address 0x4 - core index']
  #allocation1 [shape = 'u32[72,128]{1,0:T(1,128)}', space=vmem, size = 0x9000, scoped, tag = 'internal scratch']
  %s0 = inlined_call_operand.vmem [shape: bf16[2,152,4], index: 0, kind: input, shape index: {}]
  %s1 = inlined_call_operand.vmem [shape: bf16[9,4,128], index: 1, kind: input, shape index: {}]
  %s2 = inlined_call_operand.vmem [shape: f32[1,128], index: 2, kind: input, shape index: {}]
  %s3 = inlined_call_operand.hbm [shape: bf16[2,96,128], index: 3, kind: output, shape index: {}]
  %s4 = sld [smem:[#allocation0]]
  $region45: #{tpu_custom_call.1} parent=0
    _
  %s6 = ssub.s32 1, %s4
  %s7 = scalar_select 0, %s6, %s4
  $region1: #{tpu_custom_call.1} parent=0
    #allocation2 [shape = 'u8[49152]{0}', space=vmem, size = 0xc000, scoped, tag = 'output window, operand 0']
    #allocation3 [shape = 's32[2]{0}', space=sflag, size = 0x8, scoped, tag = 'scoped memory for tpu_custom_call.1']
    %8 = vsyncpa [#allocation3], 0
    %s9 = scalar_lea.sflag [#allocation3], 1
    %10 = vsyncpa %s9, 0
    loop: start=0, step=1, limit=4
    $region2: #{tpu_custom_call.1} parent=1 // loop_pre_header
      _
    $region3: #{tpu_custom_call.1} parent=1 // loop_header
      %s12 = sphi 0, %s16
      %p13 = scmp.ge.s32.totalorder %s12, 4
      %s22 = sphi 0, %s24
      %s25 = sphi 0, %s22
      %s26 = sphi 0, %s25
      %s42 = sphi 0, %s26
      %s46 = sphi 0, %s46
      %s48 = sphi 0, %s46
      %s49 = sphi 0, %s48
      %s63 = sphi 0, %s49
      %s67 = sphi 0, %s67
      %s69 = sphi 0, %s67
      %s70 = sphi 0, %s69
      %s84 = sphi 0, %s70
      %s90 = sphi 0, %s92
      %s93 = sphi 0, %s90
      %s94 = sphi 0, %s93
      %s110 = sphi 0, %s94
    $region4: #{tpu_custom_call.1} parent=1 // loop_header_branch
      %15 = sbr.rel (%p13) target = $region8
    $region5: #{tpu_custom_call.1} parent=1 // loop_body
      %s17 = ssub.s32 %s12, 1
      %s18 = ssub.s32 %s12, 2
      %s19 = sadd.s32 %s12, 1
      %s20 = ssub.s32 %s12, %s19
      %p21 = scmp.eq.s32.totalorder %s20, 0
      %s23 = sadd.s32 %s22, 1
      %s24 = scalar_select %p21, %s22, %s23
      %p27 = pneg %p21
      %p28 = scmp.eq.s32.totalorder %s12, 1
      %p29 = por %p27, %p28
      %p30 = scmp.ne.s32.totalorder %s22, %s25
      %p31 = scmp.eq.s32.totalorder %s12, 0
      %p32 = por %p30, %p31
      %p33 = scmp.ne.s32.totalorder %s22, %s25
      %p34 = scmp.eq.s32.totalorder %s17, 1
      %p35 = por %p33, %p34
      %p36 = scmp.ne.s32.totalorder %s25, %s26
      %p37 = scmp.eq.s32.totalorder %s17, 0
      %p38 = por %p36, %p37
      %p39 = scmp.ne.s32.totalorder %s25, %s26
      %p40 = scmp.eq.s32.totalorder %s18, 1
      %p41 = por %p39, %p40
      %p43 = scmp.ne.s32.totalorder %s26, %s42
      %p44 = scmp.eq.s32.totalorder %s18, 0
      %p45 = por %p43, %p44
      %s47 = sadd.s32 %s46, 1
      %p50 = scmp.eq.s32.totalorder %s12, 1
      %p51 = scmp.ne.s32.totalorder %s46, %s48
      %p52 = scmp.eq.s32.totalorder %s12, 0
      %p53 = por %p51, %p52
      %p54 = scmp.ne.s32.totalorder %s46, %s48
      %p55 = scmp.eq.s32.totalorder %s17, 1
      %p56 = por %p54, %p55
      %p57 = scmp.ne.s32.totalorder %s48, %s49
      %p58 = scmp.eq.s32.totalorder %s17, 0
      %p59 = por %p57, %p58
      %p60 = scmp.ne.s32.totalorder %s48, %s49
      %p61 = scmp.eq.s32.totalorder %s18, 1
      %p62 = por %p60, %p61
      %p64 = scmp.ne.s32.totalorder %s49, %s63
      %p65 = scmp.eq.s32.totalorder %s18, 0
      %p66 = por %p64, %p65
      %s68 = sadd.s32 %s67, 1
      %p71 = scmp.eq.s32.totalorder %s12, 1
      %p72 = scmp.ne.s32.totalorder %s67, %s69
      %p73 = scmp.eq.s32.totalorder %s12, 0
      %p74 = por %p72, %p73
      %p75 = scmp.ne.s32.totalorder %s67, %s69
      %p76 = scmp.eq.s32.totalorder %s17, 1
      %p77 = por %p75, %p76
      %p78 = scmp.ne.s32.totalorder %s69, %s70
      %p79 = scmp.eq.s32.totalorder %s17, 0
      %p80 = por %p78, %p79
      %p81 = scmp.ne.s32.totalorder %s69, %s70
      %p82 = scmp.eq.s32.totalorder %s18, 1
      %p83 = por %p81, %p82
      %p85 = scmp.ne.s32.totalorder %s70, %s84
      %p86 = scmp.eq.s32.totalorder %s18, 0
      %p87 = por %p85, %p86
      %s88 = ssub.s32 %s12, %s19
      %p89 = scmp.eq.s32.totalorder %s88, 0
      %s91 = sadd.s32 %s90, 1
      %s92 = scalar_select %p89, %s90, %s91
      %p95 = pneg %p89
      %p96 = scmp.eq.s32.totalorder %s12, 1
      %p97 = por %p95, %p96
      %p98 = scmp.ne.s32.totalorder %s90, %s93
      %p99 = scmp.eq.s32.totalorder %s12, 0
      %p100 = por %p98, %p99
      %p101 = scmp.ne.s32.totalorder %s90, %s93
      %p102 = scmp.eq.s32.totalorder %s17, 1
      %p103 = por %p101, %p102
      %p104 = scmp.ne.s32.totalorder %s93, %s94
      %p105 = scmp.eq.s32.totalorder %s17, 0
      %p106 = por %p104, %p105
      %p107 = scmp.ne.s32.totalorder %s93, %s94
      %p108 = scmp.eq.s32.totalorder %s18, 1
      %p109 = por %p107, %p108
      %p111 = scmp.ne.s32.totalorder %s94, %s110
      %p112 = scmp.eq.s32.totalorder %s18, 0
      %p113 = por %p111, %p112
      %p114 = scmp.le.s32.totalorder 1, %s12
      %p115 = scmp.lt.s32.totalorder %s12, 3
      %p116 = pnand %p114, %p115
      %p117 = pneg %p116
      // Predicated region
      $region9: #{tpu_custom_call.1} parent=5 // pred_check
        _
      $region10: #{tpu_custom_call.1} parent=5 // pred_check_branch
        %119 = sbr.rel (%p116) target = $region12
      $region11: #{tpu_custom_call.1} parent=5 // pred_region
        %s120 = ssub.s32 %s12, 1
        // Predicated region
        $region13: #{tpu_custom_call.1} parent=11 // pred_check
          %p121 = pneg %p59
        $region14: #{tpu_custom_call.1} parent=11 // pred_check_branch
          %123 = sbr.rel (%p121) target = $region16
        $region15: #{tpu_custom_call.1} parent=11 // pred_region
          _
        $region16: #{tpu_custom_call.1} parent=11 // pred_fallthru
          _
        // Predicated region
        $region17: #{tpu_custom_call.1} parent=11 // pred_check
          %p124 = pneg %p80
        $region18: #{tpu_custom_call.1} parent=11 // pred_check_branch
          %126 = sbr.rel (%p124) target = $region20
        $region19: #{tpu_custom_call.1} parent=11 // pred_region
          _
        $region20: #{tpu_custom_call.1} parent=11 // pred_fallthru
          _
      $region12: #{tpu_custom_call.1} parent=5 // pred_fallthru
        _
      %p127 = scmp.lt.s32.totalorder %s12, 2
      // Predicated region
      $region21: #{tpu_custom_call.1} parent=5 // pred_check
        %p128 = pneg %p127
      $region22: #{tpu_custom_call.1} parent=5 // pred_check_branch
        %130 = sbr.rel (%p128) target = $region24
      $region23: #{tpu_custom_call.1} parent=5 // pred_region
        // Predicated region
        $region25: #{tpu_custom_call.1} parent=23 // pred_check
          %p131 = pneg %p32
        $region26: #{tpu_custom_call.1} parent=23 // pred_check_branch
          %133 = sbr.rel (%p131) target = $region28
        $region27: #{tpu_custom_call.1} parent=23 // pred_region
          %p134 = scmp.lt.s32.totalorder %s12, 1
          %s135 = scalar_select %p134, %s12, 1
          %s136 = smul.addr %s135, 19
          %s137 = smul.addr %s136, 4
          %s138 = scalar_lea.vmem %s0, %s137
        $region28: #{tpu_custom_call.1} parent=23 // pred_fallthru
          _
      $region24: #{tpu_custom_call.1} parent=5 // pred_fallthru
        _
      %p139 = scmp.le.s32.totalorder 1, %s12
      %p140 = scmp.lt.s32.totalorder %s12, 3
      %p141 = pnand %p139, %p140
      %p142 = pneg %p141
      // Predicated region
      $region29: #{tpu_custom_call.1} parent=5 // pred_check
        _
      $region30: #{tpu_custom_call.1} parent=5 // pred_check_branch
        %144 = sbr.rel (%p141) target = $region32
      $region31: #{tpu_custom_call.1} parent=5 // pred_region
        %s145 = ssub.s32 %s12, 1
        %p146 = scmp.lt.s32.totalorder %s17, 1
        %s147 = scalar_select %p146, %s17, 1
        %s148 = smul.addr %s147, 19
        %s149 = smul.addr %s148, 4
        %s150 = scalar_lea.vmem %s0, %s149
        %p151 = pneg %p38
        %p152 = pneg %p35
        %p153 = pneg %p59
        %p154 = pneg %p56
        %p155 = pneg %p80
        %p156 = pneg %p77
        %p157 = pneg %p106
        %p158 = pneg %p103
        %s159 = sand.u32 %s93, 1
        %s160 = scalar_lea.sflag [#allocation3], %s159
        %s161 = sand.u32 %s93, 1
        %s162 = smul.addr %s161, 48
        %s163 = scalar_lea.vmem [#allocation2], %s162
        %p164 = scmp.lt.s32.totalorder %s17, 1
        %s165 = scalar_select %p164, %s17, 1
        %s166 = smul.addr %s165, 19
        %s167 = smul.addr %s166, 4
        %s168 = scalar_lea.vmem %s0, %s167
        %v170 = vld [vmem:[%s168] sm:$0xf]
        %v171 = vld [vmem:[%s168 + $0x4] sm:$0xf]
        %v172 = vld [vmem:[%s168 + $0x8] sm:$0xf]
        %v173 = vld [vmem:[%s168 + $0xc] sm:$0xf]
        %v174 = vld [vmem:[%s168 + $0x10] sm:$0xf]
        %v175 = vld [vmem:[%s168 + $0x14] sm:$0xf]
        %v176 = vld [vmem:[%s168 + $0x18] sm:$0xf]
        %v177 = vld [vmem:[%s168 + $0x1c] sm:$0xf]
        %v178 = vld [vmem:[%s168 + $0x20] sm:$0xf]
        %v179 = vld [vmem:[%s168 + $0x24] sm:$0xf]
        %v180 = vld [vmem:[%s168 + $0x28] sm:$0xf]
        %v181 = vld [vmem:[%s168 + $0x2c] sm:$0xf]
        %v182 = vld [vmem:[%s1] sm:$0x3]
        %v183 = vld [vmem:[%s168] sm:$0xe]
        %v184 = vld [vmem:[%s168 + $0x30] sm:$0x1]
        %s185 = scalar_lea.vmem %s1, 2
        %v186 = vld [vmem:[%s185] sm:$0x3]
        %v200 = vunpack.c.l.b16 %v183
        %v201 = vunpack.c.l.b16 %v171
        %v202 = vunpack.c.l.b16 %v172
        %v203 = vunpack.c.l.b16 %v173
        %v204 = vunpack.c.l.b16 %v174
        %v205 = vunpack.c.l.b16 %v175
        %v206 = vunpack.c.l.b16 %v176
        %v207 = vunpack.c.l.b16 %v177
        %v208 = vunpack.c.l.b16 %v178
        %v209 = vunpack.c.l.b16 %v179
        %v210 = vunpack.c.l.b16 %v180
        %v211 = vunpack.c.l.b16 %v181
        %v212 = vunpack.c.l.b16 %v184
        %v213 = vpack.c.b16 %v201, %v200
        %v214 = vpack.c.b16 %v203, %v202
        %v215 = vpack.c.b16 %v205, %v204
        %v216 = vpack.c.b16 %v207, %v206
        %v217 = vpack.c.b16 %v209, %v208
        %v218 = vpack.c.b16 %v211, %v210
        %v219 = vpack.c.b16 %v212, %v212
        %vm220 = vcmask 1046528
        %v221 = vrot.slane %v213, 1
        %v222 = vrot.slane %v214, 1
        %v223 = vsel %vm220, %v221, %v222
        %v224 = vrot.slane %v215, 1
        %v225 = vsel %vm220, %v222, %v224
        %v226 = vrot.slane %v216, 1
        %v227 = vsel %vm220, %v224, %v226
        %v228 = vrot.slane %v217, 1
        %v229 = vsel %vm220, %v226, %v228
        %v230 = vrot.slane %v218, 1
        %v231 = vsel %vm220, %v228, %v230
        %v232 = vrot.slane %v219, 1
        %v233 = vsel %vm220, %v230, %v232
        %vm234 = vcmask 31744
        %v236 = vsel %vm234, %v223, 0
        %v239 = vsel %vm234, %v225, 0
        %v242 = vsel %vm234, %v227, 0
        %v245 = vsel %vm234, %v229, 0
        %v248 = vsel %vm234, %v231, 0
        %v251 = vsel %vm234, %v233, 0
        %vm253 = vcmask 1041408
        %v255 = vsel %vm253, %v186, 0
        %257 = vmatpush.bf16.msra.mxu0 0
        %258 = vmatpush.bf16.msra.mxu0 0
        %259 = vmatpush.bf16.msra.mxu0 0
        %260 = vmatpush.bf16.msra.mxu0 0
        %261 = vmatpush.bf16.msra.mxu0 0
        %262 = vmatpush.bf16.msra.mxu0 0
        %263 = vmatpush.bf16.msra.mxu0 0
        %264 = vmatpush.bf16.msra.mxu0 %v255
        %265 = vmatmul.bf16.gmra.mxu0 %v236
        %v266 = vpop.f32.mrf.mxu0
        %v267 = vadd.f32 0.0, %v266
        %v268 = vpop.f32.mrf.mxu0
        %v269 = vadd.f32 0.0, %v268
        %270 = vmatmul.bf16.gmra.mxu0 %v239
        %v271 = vpop.f32.mrf.mxu0
        %v272 = vadd.f32 0.0, %v271
        %v273 = vpop.f32.mrf.mxu0
        %v274 = vadd.f32 0.0, %v273
        %275 = vmatmul.bf16.gmra.mxu0 %v242
        %v276 = vpop.f32.mrf.mxu0
        %v277 = vadd.f32 0.0, %v276
        %v278 = vpop.f32.mrf.mxu0
        %v279 = vadd.f32 0.0, %v278
        %280 = vmatmul.bf16.gmra.mxu0 %v245
        %v281 = vpop.f32.mrf.mxu0
        %v282 = vadd.f32 0.0, %v281
        %v283 = vpop.f32.mrf.mxu0
        %v284 = vadd.f32 0.0, %v283
        %285 = vmatmul.bf16.gmra.mxu0 %v248
        %v286 = vpop.f32.mrf.mxu0
        %v287 = vadd.f32 0.0, %v286
        %v288 = vpop.f32.mrf.mxu0
        %v289 = vadd.f32 0.0, %v288
        %290 = vmatmul.bf16.gmra.mxu0 %v251
        %v291 = vpop.f32.mrf.mxu0
        %v292 = vadd.f32 0.0, %v291
        %v293 = vpop.f32.mrf.mxu0
        %v294 = vadd.f32 0.0, %v293
        %295 = vdwg.mxu0
        %v297 = vunpack.c.l.b16 %v170
        %v298 = vpack.c.b16 %v201, %v297
        %v300 = vsel %vm234, %v298, 0
        %v303 = vsel %vm234, %v214, 0
        %v306 = vsel %vm234, %v215, 0
        %v309 = vsel %vm234, %v216, 0
        %v312 = vsel %vm234, %v217, 0
        %v315 = vsel %vm234, %v218, 0
        %v318 = vsel %vm253, %v182, 0
        %320 = vmatpush.bf16.msra.mxu0 0
        %321 = vmatpush.bf16.msra.mxu0 0
        %322 = vmatpush.bf16.msra.mxu0 0
        %323 = vmatpush.bf16.msra.mxu0 0
        %324 = vmatpush.bf16.msra.mxu0 0
        %325 = vmatpush.bf16.msra.mxu0 0
        %326 = vmatpush.bf16.msra.mxu0 0
        %327 = vmatpush.bf16.msra.mxu0 %v318
        %328 = vmatmul.bf16.gmra.mxu0 %v300
        %v329 = vpop.f32.mrf.mxu0
        %v330 = vadd.f32 %v267, %v329
        %v331 = vpop.f32.mrf.mxu0
        %v332 = vadd.f32 %v269, %v331
        %333 = vmatmul.bf16.gmra.mxu0 %v303
        %v334 = vpop.f32.mrf.mxu0
        %v335 = vadd.f32 %v272, %v334
        %v336 = vpop.f32.mrf.mxu0
        %v337 = vadd.f32 %v274, %v336
        %338 = vmatmul.bf16.gmra.mxu0 %v306
        %v339 = vpop.f32.mrf.mxu0
        %v340 = vadd.f32 %v277, %v339
        %v341 = vpop.f32.mrf.mxu0
        %v342 = vadd.f32 %v279, %v341
        %343 = vmatmul.bf16.gmra.mxu0 %v309
        %v344 = vpop.f32.mrf.mxu0
        %v345 = vadd.f32 %v282, %v344
        %v346 = vpop.f32.mrf.mxu0
        %v347 = vadd.f32 %v284, %v346
        %348 = vmatmul.bf16.gmra.mxu0 %v312
        %v349 = vpop.f32.mrf.mxu0
        %v350 = vadd.f32 %v287, %v349
        %v351 = vpop.f32.mrf.mxu0
        %v352 = vadd.f32 %v289, %v351
        %353 = vmatmul.bf16.gmra.mxu0 %v315
        %v354 = vpop.f32.mrf.mxu0
        %v355 = vadd.f32 %v292, %v354
        %v356 = vpop.f32.mrf.mxu0
        %v357 = vadd.f32 %v294, %v356
        %358 = vdwg.mxu0
        %v359 = vld [vmem:[%s168] sm:$0xc]
        %v360 = vld [vmem:[%s168 + $0x30] sm:$0x3]
        %s361 = scalar_lea.vmem %s1, 4
        %v362 = vld [vmem:[%s361] sm:$0x3]
        %v365 = vunpack.c.l.b16 %v359
        %v366 = vunpack.c.l.b16 %v360
        %v367 = vpack.c.b16 %v201, %v365
        %v368 = vpack.c.b16 %v366, %v366
        %vm369 = vcmask 1045504
        %v370 = vrot.slane %v367, 2
        %v371 = vrot.slane %v214, 2
        %v372 = vsel %vm369, %v370, %v371
        %v373 = vrot.slane %v215, 2
        %v374 = vsel %vm369, %v371, %v373
        %v375 = vrot.slane %v216, 2
        %v376 = vsel %vm369, %v373, %v375
        %v377 = vrot.slane %v217, 2
        %v378 = vsel %vm369, %v375, %v377
        %v379 = vrot.slane %v218, 2
        %v380 = vsel %vm369, %v377, %v379
        %v381 = vrot.slane %v368, 2
        %v382 = vsel %vm369, %v379, %v381
        %v384 = vsel %vm234, %v372, 0
        %v387 = vsel %vm234, %v374, 0
        %v390 = vsel %vm234, %v376, 0
        %v393 = vsel %vm234, %v378, 0
        %v396 = vsel %vm234, %v380, 0
        %v399 = vsel %vm234, %v382, 0
        %v402 = vsel %vm253, %v362, 0
        %404 = vmatpush.bf16.msra.mxu0 0
        %405 = vmatpush.bf16.msra.mxu0 0
        %406 = vmatpush.bf16.msra.mxu0 0
        %407 = vmatpush.bf16.msra.mxu0 0
        %408 = vmatpush.bf16.msra.mxu0 0
        %409 = vmatpush.bf16.msra.mxu0 0
        %410 = vmatpush.bf16.msra.mxu0 0
        %411 = vmatpush.bf16.msra.mxu0 %v402
        %412 = vmatmul.bf16.gmra.mxu0 %v384
        %v413 = vpop.f32.mrf.mxu0
        %v414 = vadd.f32 0.0, %v413
        %v415 = vpop.f32.mrf.mxu0
        %v416 = vadd.f32 0.0, %v415
        %417 = vmatmul.bf16.gmra.mxu0 %v387
        %v418 = vpop.f32.mrf.mxu0
        %v419 = vadd.f32 0.0, %v418
        %v420 = vpop.f32.mrf.mxu0
        %v421 = vadd.f32 0.0, %v420
        %422 = vmatmul.bf16.gmra.mxu0 %v390
        %v423 = vpop.f32.mrf.mxu0
        %v424 = vadd.f32 0.0, %v423
        %v425 = vpop.f32.mrf.mxu0
        %v426 = vadd.f32 0.0, %v425
        %427 = vmatmul.bf16.gmra.mxu0 %v393
        %v428 = vpop.f32.mrf.mxu0
        %v429 = vadd.f32 0.0, %v428
        %v430 = vpop.f32.mrf.mxu0
        %v431 = vadd.f32 0.0, %v430
        %432 = vmatmul.bf16.gmra.mxu0 %v396
        %v433 = vpop.f32.mrf.mxu0
        %v434 = vadd.f32 0.0, %v433
        %v435 = vpop.f32.mrf.mxu0
        %v436 = vadd.f32 0.0, %v435
        %437 = vmatmul.bf16.gmra.mxu0 %v399
        %v438 = vpop.f32.mrf.mxu0
        %v439 = vadd.f32 0.0, %v438
        %v440 = vpop.f32.mrf.mxu0
        %v441 = vadd.f32 0.0, %v440
        %442 = vdwg.mxu0
        %v443 = vadd.f32 %v330, %v414
        %v444 = vadd.f32 %v332, %v416
        %v445 = vadd.f32 %v335, %v419
        %v446 = vadd.f32 %v337, %v421
        %v447 = vadd.f32 %v340, %v424
        %v448 = vadd.f32 %v342, %v426
        %v449 = vadd.f32 %v345, %v429
        %v450 = vadd.f32 %v347, %v431
        %v451 = vadd.f32 %v350, %v434
        %v452 = vadd.f32 %v352, %v436
        %v453 = vadd.f32 %v355, %v439
        %v454 = vadd.f32 %v357, %v441
        %v455 = vld [vmem:[%s168 + $0xc] sm:$0xf]
        %v456 = vld [vmem:[%s168 + $0x10] sm:$0xf]
        %v457 = vld [vmem:[%s168 + $0x14] sm:$0xf]
        %v458 = vld [vmem:[%s168 + $0x18] sm:$0xf]
        %v459 = vld [vmem:[%s168 + $0x1c] sm:$0xf]
        %v460 = vld [vmem:[%s168 + $0x20] sm:$0xf]
        %v461 = vld [vmem:[%s168 + $0x24] sm:$0xf]
        %v462 = vld [vmem:[%s168 + $0x28] sm:$0xf]
        %v463 = vld [vmem:[%s168 + $0x2c] sm:$0xf]
        %v464 = vld [vmem:[%s168 + $0x30] sm:$0xf]
        %v465 = vld [vmem:[%s168 + $0x34] sm:$0xf]
        %v466 = vld [vmem:[%s168 + $0x38] sm:$0xf]
        %s467 = scalar_lea.vmem %s1, 6
        %v468 = vld [vmem:[%s467] sm:$0x3]
        %v481 = vunpack.c.l.b16 %v455
        %v482 = vunpack.c.l.b16 %v456
        %v483 = vunpack.c.l.b16 %v457
        %v484 = vunpack.c.l.b16 %v458
        %v485 = vunpack.c.l.b16 %v459
        %v486 = vunpack.c.l.b16 %v460
        %v487 = vunpack.c.l.b16 %v461
        %v488 = vunpack.c.l.b16 %v462
        %v489 = vunpack.c.l.b16 %v463
        %v490 = vunpack.c.l.b16 %v464
        %v491 = vunpack.c.l.b16 %v465
        %v492 = vunpack.c.l.b16 %v466
        %v493 = vpack.c.b16 %v482, %v481
        %v494 = vpack.c.b16 %v484, %v483
        %v495 = vpack.c.b16 %v486, %v485
        %v496 = vpack.c.b16 %v488, %v487
        %v497 = vpack.c.b16 %v490, %v489
        %v498 = vpack.c.b16 %v492, %v491
        %v500 = vsel %vm234, %v493, 0
        %v503 = vsel %vm234, %v494, 0
        %v506 = vsel %vm234, %v495, 0
        %v509 = vsel %vm234, %v496, 0
        %v512 = vsel %vm234, %v497, 0
        %v515 = vsel %vm234, %v498, 0
        %v518 = vsel %vm253, %v468, 0
        %520 = vmatpush.bf16.msra.mxu0 0
        %521 = vmatpush.bf16.msra.mxu0 0
        %522 = vmatpush.bf16.msra.mxu0 0
        %523 = vmatpush.bf16.msra.mxu0 0
        %524 = vmatpush.bf16.msra.mxu0 0
        %525 = vmatpush.bf16.msra.mxu0 0
        %526 = vmatpush.bf16.msra.mxu0 0
        %527 = vmatpush.bf16.msra.mxu0 %v518
        %528 = vmatmul.bf16.gmra.mxu0 %v500
        %v529 = vpop.f32.mrf.mxu0
        %v530 = vadd.f32 0.0, %v529
        %v531 = vpop.f32.mrf.mxu0
        %v532 = vadd.f32 0.0, %v531
        %533 = vmatmul.bf16.gmra.mxu0 %v503
        %v534 = vpop.f32.mrf.mxu0
        %v535 = vadd.f32 0.0, %v534
        %v536 = vpop.f32.mrf.mxu0
        %v537 = vadd.f32 0.0, %v536
        %538 = vmatmul.bf16.gmra.mxu0 %v506
        %v539 = vpop.f32.mrf.mxu0
        %v540 = vadd.f32 0.0, %v539
        %v541 = vpop.f32.mrf.mxu0
        %v542 = vadd.f32 0.0, %v541
        %543 = vmatmul.bf16.gmra.mxu0 %v509
        %v544 = vpop.f32.mrf.mxu0
        %v545 = vadd.f32 0.0, %v544
        %v546 = vpop.f32.mrf.mxu0
        %v547 = vadd.f32 0.0, %v546
        %548 = vmatmul.bf16.gmra.mxu0 %v512
        %v549 = vpop.f32.mrf.mxu0
        %v550 = vadd.f32 0.0, %v549
        %v551 = vpop.f32.mrf.mxu0
        %v552 = vadd.f32 0.0, %v551
        %553 = vmatmul.bf16.gmra.mxu0 %v515
        %v554 = vpop.f32.mrf.mxu0
        %v555 = vadd.f32 0.0, %v554
        %v556 = vpop.f32.mrf.mxu0
        %v557 = vadd.f32 0.0, %v556
        %558 = vdwg.mxu0
        %v559 = vadd.f32 %v443, %v530
        %v560 = vadd.f32 %v444, %v532
        %v561 = vadd.f32 %v445, %v535
        %v562 = vadd.f32 %v446, %v537
        %v563 = vadd.f32 %v447, %v540
        %v564 = vadd.f32 %v448, %v542
        %v565 = vadd.f32 %v449, %v545
        %v566 = vadd.f32 %v450, %v547
        %v567 = vadd.f32 %v451, %v550
        %v568 = vadd.f32 %v452, %v552
        %v569 = vadd.f32 %v453, %v555
        %v570 = vadd.f32 %v454, %v557
        %v571 = vld [vmem:[%s168 + $0xc] sm:$0xe]
        %v572 = vld [vmem:[%s168 + $0x10] sm:$0xf]
        %v573 = vld [vmem:[%s168 + $0x14] sm:$0xf]
        %v574 = vld [vmem:[%s168 + $0x18] sm:$0xf]
        %v575 = vld [vmem:[%s168 + $0x1c] sm:$0xf]
        %v576 = vld [vmem:[%s168 + $0x20] sm:$0xf]
        %v577 = vld [vmem:[%s168 + $0x24] sm:$0xf]
        %v578 = vld [vmem:[%s168 + $0x28] sm:$0xf]
        %v579 = vld [vmem:[%s168 + $0x2c] sm:$0xf]
        %v580 = vld [vmem:[%s168 + $0x30] sm:$0xf]
        %v581 = vld [vmem:[%s168 + $0x34] sm:$0xf]
        %v582 = vld [vmem:[%s168 + $0x38] sm:$0xf]
        %v583 = vld [vmem:[%s168 + $0x3c] sm:$0x1]
        %s584 = scalar_lea.vmem %s1, 8
        %v585 = vld [vmem:[%s584] sm:$0x3]
        %v599 = vunpack.c.l.b16 %v571
        %v600 = vunpack.c.l.b16 %v572
        %v601 = vunpack.c.l.b16 %v573
        %v602 = vunpack.c.l.b16 %v574
        %v603 = vunpack.c.l.b16 %v575
        %v604 = vunpack.c.l.b16 %v576
        %v605 = vunpack.c.l.b16 %v577
        %v606 = vunpack.c.l.b16 %v578
        %v607 = vunpack.c.l.b16 %v579
        %v608 = vunpack.c.l.b16 %v580
        %v609 = vunpack.c.l.b16 %v581
        %v610 = vunpack.c.l.b16 %v582
        %v611 = vunpack.c.l.b16 %v583
        %v612 = vpack.c.b16 %v600, %v599
        %v613 = vpack.c.b16 %v602, %v601
        %v614 = vpack.c.b16 %v604, %v603
        %v615 = vpack.c.b16 %v606, %v605
        %v616 = vpack.c.b16 %v608, %v607
        %v617 = vpack.c.b16 %v610, %v609
        %v618 = vpack.c.b16 %v611, %v611
        %v619 = vrot.slane %v612, 1
        %v620 = vrot.slane %v613, 1
        %v621 = vsel %vm220, %v619, %v620
        %v622 = vrot.slane %v614, 1
        %v623 = vsel %vm220, %v620, %v622
        %v624 = vrot.slane %v615, 1
        %v625 = vsel %vm220, %v622, %v624
        %v626 = vrot.slane %v616, 1
        %v627 = vsel %vm220, %v624, %v626
        %v628 = vrot.slane %v617, 1
        %v629 = vsel %vm220, %v626, %v628
        %v630 = vrot.slane %v618, 1
        %v631 = vsel %vm220, %v628, %v630
        %v633 = vsel %vm234, %v621, 0
        %v636 = vsel %vm234, %v623, 0
        %v639 = vsel %vm234, %v625, 0
        %v642 = vsel %vm234, %v627, 0
        %v645 = vsel %vm234, %v629, 0
        %v648 = vsel %vm234, %v631, 0
        %v651 = vsel %vm253, %v585, 0
        %653 = vmatpush.bf16.msra.mxu0 0
        %654 = vmatpush.bf16.msra.mxu0 0
        %655 = vmatpush.bf16.msra.mxu0 0
        %656 = vmatpush.bf16.msra.mxu0 0
        %657 = vmatpush.bf16.msra.mxu0 0
        %658 = vmatpush.bf16.msra.mxu0 0
        %659 = vmatpush.bf16.msra.mxu0 0
        %660 = vmatpush.bf16.msra.mxu0 %v651
        %661 = vmatmul.bf16.gmra.mxu0 %v633
        %v662 = vpop.f32.mrf.mxu0
        %v663 = vadd.f32 0.0, %v662
        %v664 = vpop.f32.mrf.mxu0
        %v665 = vadd.f32 0.0, %v664
        %666 = vmatmul.bf16.gmra.mxu0 %v636
        %v667 = vpop.f32.mrf.mxu0
        %v668 = vadd.f32 0.0, %v667
        %v669 = vpop.f32.mrf.mxu0
        %v670 = vadd.f32 0.0, %v669
        %671 = vmatmul.bf16.gmra.mxu0 %v639
        %v672 = vpop.f32.mrf.mxu0
        %v673 = vadd.f32 0.0, %v672
        %v674 = vpop.f32.mrf.mxu0
        %v675 = vadd.f32 0.0, %v674
        %676 = vmatmul.bf16.gmra.mxu0 %v642
        %v677 = vpop.f32.mrf.mxu0
        %v678 = vadd.f32 0.0, %v677
        %v679 = vpop.f32.mrf.mxu0
        %v680 = vadd.f32 0.0, %v679
        %681 = vmatmul.bf16.gmra.mxu0 %v645
        %v682 = vpop.f32.mrf.mxu0
        %v683 = vadd.f32 0.0, %v682
        %v684 = vpop.f32.mrf.mxu0
        %v685 = vadd.f32 0.0, %v684
        %686 = vmatmul.bf16.gmra.mxu0 %v648
        %v687 = vpop.f32.mrf.mxu0
        %v688 = vadd.f32 0.0, %v687
        %v689 = vpop.f32.mrf.mxu0
        %v690 = vadd.f32 0.0, %v689
        %691 = vdwg.mxu0
        %v692 = vadd.f32 %v559, %v663
        %v693 = vadd.f32 %v560, %v665
        %v694 = vadd.f32 %v561, %v668
        %v695 = vadd.f32 %v562, %v670
        %v696 = vadd.f32 %v563, %v673
        %v697 = vadd.f32 %v564, %v675
        %v698 = vadd.f32 %v565, %v678
        %v699 = vadd.f32 %v566, %v680
        %v700 = vadd.f32 %v567, %v683
        %v701 = vadd.f32 %v568, %v685
        %v702 = vadd.f32 %v569, %v688
        %v703 = vadd.f32 %v570, %v690
        %v704 = vld [vmem:[%s168 + $0xc] sm:$0xc]
        %v705 = vld [vmem:[%s168 + $0x3c] sm:$0x3]
        %s706 = scalar_lea.vmem %s1, 10
        %v707 = vld [vmem:[%s706] sm:$0x3]
        %v710 = vunpack.c.l.b16 %v704
        %v711 = vunpack.c.l.b16 %v705
        %v712 = vpack.c.b16 %v600, %v710
        %v713 = vpack.c.b16 %v711, %v711
        %v714 = vrot.slane %v712, 2
        %v715 = vrot.slane %v613, 2
        %v716 = vsel %vm369, %v714, %v715
        %v717 = vrot.slane %v614, 2
        %v718 = vsel %vm369, %v715, %v717
        %v719 = vrot.slane %v615, 2
        %v720 = vsel %vm369, %v717, %v719
        %v721 = vrot.slane %v616, 2
        %v722 = vsel %vm369, %v719, %v721
        %v723 = vrot.slane %v617, 2
        %v724 = vsel %vm369, %v721, %v723
        %v725 = vrot.slane %v713, 2
        %v726 = vsel %vm369, %v723, %v725
        %v728 = vsel %vm234, %v716, 0
        %v731 = vsel %vm234, %v718, 0
        %v734 = vsel %vm234, %v720, 0
        %v737 = vsel %vm234, %v722, 0
        %v740 = vsel %vm234, %v724, 0
        %v743 = vsel %vm234, %v726, 0
        %v746 = vsel %vm253, %v707, 0
        %748 = vmatpush.bf16.msra.mxu0 0
        %749 = vmatpush.bf16.msra.mxu0 0
        %750 = vmatpush.bf16.msra.mxu0 0
        %751 = vmatpush.bf16.msra.mxu0 0
        %752 = vmatpush.bf16.msra.mxu0 0
        %753 = vmatpush.bf16.msra.mxu0 0
        %754 = vmatpush.bf16.msra.mxu0 0
        %755 = vmatpush.bf16.msra.mxu0 %v746
        %756 = vmatmul.bf16.gmra.mxu0 %v728
        %v757 = vpop.f32.mrf.mxu0
        %v758 = vadd.f32 0.0, %v757
        %v759 = vpop.f32.mrf.mxu0
        %v760 = vadd.f32 0.0, %v759
        %761 = vmatmul.bf16.gmra.mxu0 %v731
        %v762 = vpop.f32.mrf.mxu0
        %v763 = vadd.f32 0.0, %v762
        %v764 = vpop.f32.mrf.mxu0
        %v765 = vadd.f32 0.0, %v764
        %766 = vmatmul.bf16.gmra.mxu0 %v734
        %v767 = vpop.f32.mrf.mxu0
        %v768 = vadd.f32 0.0, %v767
        %v769 = vpop.f32.mrf.mxu0
        %v770 = vadd.f32 0.0, %v769
        %771 = vmatmul.bf16.gmra.mxu0 %v737
        %v772 = vpop.f32.mrf.mxu0
        %v773 = vadd.f32 0.0, %v772
        %v774 = vpop.f32.mrf.mxu0
        %v775 = vadd.f32 0.0, %v774
        %776 = vmatmul.bf16.gmra.mxu0 %v740
        %v777 = vpop.f32.mrf.mxu0
        %v778 = vadd.f32 0.0, %v777
        %v779 = vpop.f32.mrf.mxu0
        %v780 = vadd.f32 0.0, %v779
        %781 = vmatmul.bf16.gmra.mxu0 %v743
        %v782 = vpop.f32.mrf.mxu0
        %v783 = vadd.f32 0.0, %v782
        %v784 = vpop.f32.mrf.mxu0
        %v785 = vadd.f32 0.0, %v784
        %786 = vdwg.mxu0
        %v787 = vadd.f32 %v692, %v758
        %v788 = vadd.f32 %v693, %v760
        %v789 = vadd.f32 %v694, %v763
        %v790 = vadd.f32 %v695, %v765
        %v791 = vadd.f32 %v696, %v768
        %v792 = vadd.f32 %v697, %v770
        %v793 = vadd.f32 %v698, %v773
        %v794 = vadd.f32 %v699, %v775
        %v795 = vadd.f32 %v700, %v778
        %v796 = vadd.f32 %v701, %v780
        %v797 = vadd.f32 %v702, %v783
        %v798 = vadd.f32 %v703, %v785
        %v799 = vld [vmem:[%s168 + $0x18] sm:$0xf]
        %v800 = vld [vmem:[%s168 + $0x1c] sm:$0xf]
        %v801 = vld [vmem:[%s168 + $0x20] sm:$0xf]
        %v802 = vld [vmem:[%s168 + $0x24] sm:$0xf]
        %v803 = vld [vmem:[%s168 + $0x28] sm:$0xf]
        %v804 = vld [vmem:[%s168 + $0x2c] sm:$0xf]
        %v805 = vld [vmem:[%s168 + $0x30] sm:$0xf]
        %v806 = vld [vmem:[%s168 + $0x34] sm:$0xf]
        %v807 = vld [vmem:[%s168 + $0x38] sm:$0xf]
        %v808 = vld [vmem:[%s168 + $0x3c] sm:$0xf]
        %v809 = vld [vmem:[%s168 + $0x40] sm:$0xf]
        %v810 = vld [vmem:[%s168 + $0x44] sm:$0xf]
        %s811 = scalar_lea.vmem %s1, 12
        %v812 = vld [vmem:[%s811] sm:$0x3]
        %v825 = vunpack.c.l.b16 %v799
        %v826 = vunpack.c.l.b16 %v800
        %v827 = vunpack.c.l.b16 %v801
        %v828 = vunpack.c.l.b16 %v802
        %v829 = vunpack.c.l.b16 %v803
        %v830 = vunpack.c.l.b16 %v804
        %v831 = vunpack.c.l.b16 %v805
        %v832 = vunpack.c.l.b16 %v806
        %v833 = vunpack.c.l.b16 %v807
        %v834 = vunpack.c.l.b16 %v808
        %v835 = vunpack.c.l.b16 %v809
        %v836 = vunpack.c.l.b16 %v810
        %v837 = vpack.c.b16 %v826, %v825
        %v838 = vpack.c.b16 %v828, %v827
        %v839 = vpack.c.b16 %v830, %v829
        %v840 = vpack.c.b16 %v832, %v831
        %v841 = vpack.c.b16 %v834, %v833
        %v842 = vpack.c.b16 %v836, %v835
        %v844 = vsel %vm234, %v837, 0
        %v847 = vsel %vm234, %v838, 0
        %v850 = vsel %vm234, %v839, 0
        %v853 = vsel %vm234, %v840, 0
        %v856 = vsel %vm234, %v841, 0
        %v859 = vsel %vm234, %v842, 0
        %v862 = vsel %vm253, %v812, 0
        %864 = vmatpush.bf16.msra.mxu0 0
        %865 = vmatpush.bf16.msra.mxu0 0
        %866 = vmatpush.bf16.msra.mxu0 0
        %867 = vmatpush.bf16.msra.mxu0 0
        %868 = vmatpush.bf16.msra.mxu0 0
        %869 = vmatpush.bf16.msra.mxu0 0
        %870 = vmatpush.bf16.msra.mxu0 0
        %871 = vmatpush.bf16.msra.mxu0 %v862
        %872 = vmatmul.bf16.gmra.mxu0 %v844
        %v873 = vpop.f32.mrf.mxu0
        %v874 = vadd.f32 0.0, %v873
        %v875 = vpop.f32.mrf.mxu0
        %v876 = vadd.f32 0.0, %v875
        %877 = vmatmul.bf16.gmra.mxu0 %v847
        %v878 = vpop.f32.mrf.mxu0
        %v879 = vadd.f32 0.0, %v878
        %v880 = vpop.f32.mrf.mxu0
        %v881 = vadd.f32 0.0, %v880
        %882 = vmatmul.bf16.gmra.mxu0 %v850
        %v883 = vpop.f32.mrf.mxu0
        %v884 = vadd.f32 0.0, %v883
        %v885 = vpop.f32.mrf.mxu0
        %v886 = vadd.f32 0.0, %v885
        %887 = vmatmul.bf16.gmra.mxu0 %v853
        %v888 = vpop.f32.mrf.mxu0
        %v889 = vadd.f32 0.0, %v888
        %v890 = vpop.f32.mrf.mxu0
        %v891 = vadd.f32 0.0, %v890
        %892 = vmatmul.bf16.gmra.mxu0 %v856
        %v893 = vpop.f32.mrf.mxu0
        %v894 = vadd.f32 0.0, %v893
        %v895 = vpop.f32.mrf.mxu0
        %v896 = vadd.f32 0.0, %v895
        %897 = vmatmul.bf16.gmra.mxu0 %v859
        %v898 = vpop.f32.mrf.mxu0
        %v899 = vadd.f32 0.0, %v898
        %v900 = vpop.f32.mrf.mxu0
        %v901 = vadd.f32 0.0, %v900
        %902 = vdwg.mxu0
        %v903 = vadd.f32 %v787, %v874
        %v904 = vadd.f32 %v788, %v876
        %v905 = vadd.f32 %v789, %v879
        %v906 = vadd.f32 %v790, %v881
        %v907 = vadd.f32 %v791, %v884
        %v908 = vadd.f32 %v792, %v886
        %v909 = vadd.f32 %v793, %v889
        %v910 = vadd.f32 %v794, %v891
        %v911 = vadd.f32 %v795, %v894
        %v912 = vadd.f32 %v796, %v896
        %v913 = vadd.f32 %v797, %v899
        %v914 = vadd.f32 %v798, %v901
        %v915 = vld [vmem:[%s168 + $0x18] sm:$0xe]
        %v916 = vld [vmem:[%s168 + $0x1c] sm:$0xf]
        %v917 = vld [vmem:[%s168 + $0x20] sm:$0xf]
        %v918 = vld [vmem:[%s168 + $0x24] sm:$0xf]
        %v919 = vld [vmem:[%s168 + $0x28] sm:$0xf]
        %v920 = vld [vmem:[%s168 + $0x2c] sm:$0xf]
        %v921 = vld [vmem:[%s168 + $0x30] sm:$0xf]
        %v922 = vld [vmem:[%s168 + $0x34] sm:$0xf]
        %v923 = vld [vmem:[%s168 + $0x38] sm:$0xf]
        %v924 = vld [vmem:[%s168 + $0x3c] sm:$0xf]
        %v925 = vld [vmem:[%s168 + $0x40] sm:$0xf]
        %v926 = vld [vmem:[%s168 + $0x44] sm:$0xf]
        %v927 = vld [vmem:[%s168 + $0x48] sm:$0x1]
        %s928 = scalar_lea.vmem %s1, 14
        %v929 = vld [vmem:[%s928] sm:$0x3]
        %v943 = vunpack.c.l.b16 %v915
        %v944 = vunpack.c.l.b16 %v916
        %v945 = vunpack.c.l.b16 %v917
        %v946 = vunpack.c.l.b16 %v918
        %v947 = vunpack.c.l.b16 %v919
        %v948 = vunpack.c.l.b16 %v920
        %v949 = vunpack.c.l.b16 %v921
        %v950 = vunpack.c.l.b16 %v922
        %v951 = vunpack.c.l.b16 %v923
        %v952 = vunpack.c.l.b16 %v924
        %v953 = vunpack.c.l.b16 %v925
        %v954 = vunpack.c.l.b16 %v926
        %v955 = vunpack.c.l.b16 %v927
        %v956 = vpack.c.b16 %v944, %v943
        %v957 = vpack.c.b16 %v946, %v945
        %v958 = vpack.c.b16 %v948, %v947
        %v959 = vpack.c.b16 %v950, %v949
        %v960 = vpack.c.b16 %v952, %v951
        %v961 = vpack.c.b16 %v954, %v953
        %v962 = vpack.c.b16 %v955, %v955
        %v963 = vrot.slane %v956, 1
        %v964 = vrot.slane %v957, 1
        %v965 = vsel %vm220, %v963, %v964
        %v966 = vrot.slane %v958, 1
        %v967 = vsel %vm220, %v964, %v966
        %v968 = vrot.slane %v959, 1
        %v969 = vsel %vm220, %v966, %v968
        %v970 = vrot.slane %v960, 1
        %v971 = vsel %vm220, %v968, %v970
        %v972 = vrot.slane %v961, 1
        %v973 = vsel %vm220, %v970, %v972
        %v974 = vrot.slane %v962, 1
        %v975 = vsel %vm220, %v972, %v974
        %v977 = vsel %vm234, %v965, 0
        %v980 = vsel %vm234, %v967, 0
        %v983 = vsel %vm234, %v969, 0
        %v986 = vsel %vm234, %v971, 0
        %v989 = vsel %vm234, %v973, 0
        %v992 = vsel %vm234, %v975, 0
        %v995 = vsel %vm253, %v929, 0
        %997 = vmatpush.bf16.msra.mxu0 0
        %998 = vmatpush.bf16.msra.mxu0 0
        %999 = vmatpush.bf16.msra.mxu0 0
        %1000 = vmatpush.bf16.msra.mxu0 0
        %1001 = vmatpush.bf16.msra.mxu0 0
        %1002 = vmatpush.bf16.msra.mxu0 0
        %1003 = vmatpush.bf16.msra.mxu0 0
        %1004 = vmatpush.bf16.msra.mxu0 %v995
        %1005 = vmatmul.bf16.gmra.mxu0 %v977
        %v1006 = vpop.f32.mrf.mxu0
        %v1007 = vadd.f32 0.0, %v1006
        %v1008 = vpop.f32.mrf.mxu0
        %v1009 = vadd.f32 0.0, %v1008
        %1010 = vmatmul.bf16.gmra.mxu0 %v980
        %v1011 = vpop.f32.mrf.mxu0
        %v1012 = vadd.f32 0.0, %v1011
        %v1013 = vpop.f32.mrf.mxu0
        %v1014 = vadd.f32 0.0, %v1013
        %1015 = vmatmul.bf16.gmra.mxu0 %v983
        %v1016 = vpop.f32.mrf.mxu0
        %v1017 = vadd.f32 0.0, %v1016
        %v1018 = vpop.f32.mrf.mxu0
        %v1019 = vadd.f32 0.0, %v1018
        %1020 = vmatmul.bf16.gmra.mxu0 %v986
        %v1021 = vpop.f32.mrf.mxu0
        %v1022 = vadd.f32 0.0, %v1021
        %v1023 = vpop.f32.mrf.mxu0
        %v1024 = vadd.f32 0.0, %v1023
        %1025 = vmatmul.bf16.gmra.mxu0 %v989
        %v1026 = vpop.f32.mrf.mxu0
        %v1027 = vadd.f32 0.0, %v1026
        %v1028 = vpop.f32.mrf.mxu0
        %v1029 = vadd.f32 0.0, %v1028
        %1030 = vmatmul.bf16.gmra.mxu0 %v992
        %v1031 = vpop.f32.mrf.mxu0
        %v1032 = vadd.f32 0.0, %v1031
        %v1033 = vpop.f32.mrf.mxu0
        %v1034 = vadd.f32 0.0, %v1033
        %1035 = vdwg.mxu0
        %v1036 = vadd.f32 %v903, %v1007
        %v1037 = vadd.f32 %v904, %v1009
        %v1038 = vadd.f32 %v905, %v1012
        %v1039 = vadd.f32 %v906, %v1014
        %v1040 = vadd.f32 %v907, %v1017
        %v1041 = vadd.f32 %v908, %v1019
        %v1042 = vadd.f32 %v909, %v1022
        %v1043 = vadd.f32 %v910, %v1024
        %v1044 = vadd.f32 %v911, %v1027
        %v1045 = vadd.f32 %v912, %v1029
        %v1046 = vadd.f32 %v913, %v1032
        %v1047 = vadd.f32 %v914, %v1034
        %v1048 = vld [vmem:[%s168 + $0x18] sm:$0xc]
        %v1049 = vld [vmem:[%s168 + $0x48] sm:$0x3]
        %s1050 = scalar_lea.vmem %s1, 16
        %v1051 = vld [vmem:[%s1050] sm:$0x3]
        %v1054 = vunpack.c.l.b16 %v1048
        %v1055 = vunpack.c.l.b16 %v1049
        %v1056 = vpack.c.b16 %v944, %v1054
        %v1057 = vpack.c.b16 %v1055, %v1055
        %v1058 = vrot.slane %v1056, 2
        %v1059 = vrot.slane %v957, 2
        %v1060 = vsel %vm369, %v1058, %v1059
        %v1061 = vrot.slane %v958, 2
        %v1062 = vsel %vm369, %v1059, %v1061
        %v1063 = vrot.slane %v959, 2
        %v1064 = vsel %vm369, %v1061, %v1063
        %v1065 = vrot.slane %v960, 2
        %v1066 = vsel %vm369, %v1063, %v1065
        %v1067 = vrot.slane %v961, 2
        %v1068 = vsel %vm369, %v1065, %v1067
        %v1069 = vrot.slane %v1057, 2
        %v1070 = vsel %vm369, %v1067, %v1069
        %v1072 = vsel %vm234, %v1060, 0
        %v1075 = vsel %vm234, %v1062, 0
        %v1078 = vsel %vm234, %v1064, 0
        %v1081 = vsel %vm234, %v1066, 0
        %v1084 = vsel %vm234, %v1068, 0
        %v1087 = vsel %vm234, %v1070, 0
        %v1090 = vsel %vm253, %v1051, 0
        %1092 = vmatpush.bf16.msra.mxu0 0
        %1093 = vmatpush.bf16.msra.mxu0 0
        %1094 = vmatpush.bf16.msra.mxu0 0
        %1095 = vmatpush.bf16.msra.mxu0 0
        %1096 = vmatpush.bf16.msra.mxu0 0
        %1097 = vmatpush.bf16.msra.mxu0 0
        %1098 = vmatpush.bf16.msra.mxu0 0
        %1099 = vmatpush.bf16.msra.mxu0 %v1090
        %1100 = vmatmul.bf16.gmra.mxu0 %v1072
        %v1101 = vpop.f32.mrf.mxu0
        %v1102 = vadd.f32 0.0, %v1101
        %v1103 = vpop.f32.mrf.mxu0
        %v1104 = vadd.f32 0.0, %v1103
        %1105 = vmatmul.bf16.gmra.mxu0 %v1075
        %v1106 = vpop.f32.mrf.mxu0
        %v1107 = vadd.f32 0.0, %v1106
        %v1108 = vpop.f32.mrf.mxu0
        %v1109 = vadd.f32 0.0, %v1108
        %1110 = vmatmul.bf16.gmra.mxu0 %v1078
        %v1111 = vpop.f32.mrf.mxu0
        %v1112 = vadd.f32 0.0, %v1111
        %v1113 = vpop.f32.mrf.mxu0
        %v1114 = vadd.f32 0.0, %v1113
        %1115 = vmatmul.bf16.gmra.mxu0 %v1081
        %v1116 = vpop.f32.mrf.mxu0
        %v1117 = vadd.f32 0.0, %v1116
        %v1118 = vpop.f32.mrf.mxu0
        %v1119 = vadd.f32 0.0, %v1118
        %1120 = vmatmul.bf16.gmra.mxu0 %v1084
        %v1121 = vpop.f32.mrf.mxu0
        %v1122 = vadd.f32 0.0, %v1121
        %v1123 = vpop.f32.mrf.mxu0
        %v1124 = vadd.f32 0.0, %v1123
        %1125 = vmatmul.bf16.gmra.mxu0 %v1087
        %v1126 = vpop.f32.mrf.mxu0
        %v1127 = vadd.f32 0.0, %v1126
        %v1128 = vpop.f32.mrf.mxu0
        %v1129 = vadd.f32 0.0, %v1128
        %1130 = vdwg.mxu0
        %v1131 = vadd.f32 %v1036, %v1102
        %v1132 = vadd.f32 %v1037, %v1104
        %v1133 = vadd.f32 %v1038, %v1107
        %v1134 = vadd.f32 %v1039, %v1109
        %v1135 = vadd.f32 %v1040, %v1112
        %v1136 = vadd.f32 %v1041, %v1114
        %v1137 = vadd.f32 %v1042, %v1117
        %v1138 = vadd.f32 %v1043, %v1119
        %v1139 = vadd.f32 %v1044, %v1122
        %v1140 = vadd.f32 %v1045, %v1124
        %v1141 = vadd.f32 %v1046, %v1127
        %v1142 = vadd.f32 %v1047, %v1129
        %v1143 = vld [vmem:[%s2] sm:$0x1]
        %v1145 = vperm.slane %v1143, 0
        %v1147 = vadd.f32 %v1131, %v1145
        %v1148 = vadd.f32 %v1132, %v1145
        %v1149 = vadd.f32 %v1133, %v1145
        %v1150 = vadd.f32 %v1134, %v1145
        %v1151 = vadd.f32 %v1135, %v1145
        %v1152 = vadd.f32 %v1136, %v1145
        %v1153 = vadd.f32 %v1137, %v1145
        %v1154 = vadd.f32 %v1138, %v1145
        %v1155 = vadd.f32 %v1139, %v1145
        %v1156 = vadd.f32 %v1140, %v1145
        %v1157 = vadd.f32 %v1141, %v1145
        %v1158 = vadd.f32 %v1142, %v1145
        %v1159 = vmax.f32 %v1147, 0.0
        %v1160 = vmax.f32 %v1148, 0.0
        %v1161 = vmax.f32 %v1149, 0.0
        %v1162 = vmax.f32 %v1150, 0.0
        %v1163 = vmax.f32 %v1151, 0.0
        %v1164 = vmax.f32 %v1152, 0.0
        %v1165 = vmax.f32 %v1153, 0.0
        %v1166 = vmax.f32 %v1154, 0.0
        %v1167 = vmax.f32 %v1155, 0.0
        %v1168 = vmax.f32 %v1156, 0.0
        %v1169 = vmax.f32 %v1157, 0.0
        %v1170 = vmax.f32 %v1158, 0.0
        %v1171 = vpack.c.bf16 %v1159, %v1159
        %v1172 = vpack.c.bf16 %v1160, %v1160
        %v1173 = vpack.c.bf16 %v1161, %v1161
        %v1174 = vpack.c.bf16 %v1162, %v1162
        %v1175 = vpack.c.bf16 %v1163, %v1163
        %v1176 = vpack.c.bf16 %v1164, %v1164
        %v1177 = vpack.c.bf16 %v1165, %v1165
        %v1178 = vpack.c.bf16 %v1166, %v1166
        %v1179 = vpack.c.bf16 %v1167, %v1167
        %v1180 = vpack.c.bf16 %v1168, %v1168
        %v1181 = vpack.c.bf16 %v1169, %v1169
        %v1182 = vpack.c.bf16 %v1170, %v1170
        %1183 = vst [vmem:[%s163] sm:$0xf] %v1171
        %1184 = vst [vmem:[%s163 + $0x4] sm:$0xf] %v1172
        %1185 = vst [vmem:[%s163 + $0x8] sm:$0xf] %v1173
        %1186 = vst [vmem:[%s163 + $0xc] sm:$0xf] %v1174
        %1187 = vst [vmem:[%s163 + $0x10] sm:$0xf] %v1175
        %1188 = vst [vmem:[%s163 + $0x14] sm:$0xf] %v1176
        %1189 = vst [vmem:[%s163 + $0x18] sm:$0xf] %v1177
        %1190 = vst [vmem:[%s163 + $0x1c] sm:$0xf] %v1178
        %1191 = vst [vmem:[%s163 + $0x20] sm:$0xf] %v1179
        %1192 = vst [vmem:[%s163 + $0x24] sm:$0xf] %v1180
        %1193 = vst [vmem:[%s163 + $0x28] sm:$0xf] %v1181
        %1194 = vst [vmem:[%s163 + $0x2c] sm:$0xf] %v1182
        %s1195 = sand.u32 %s93, 1
        %s1196 = scalar_lea.sflag [#allocation3], %s1195
        %s1197 = sand.u32 %s93, 1
        %s1198 = smul.addr %s1197, 48
        %s1199 = scalar_lea.vmem [#allocation2], %s1198
        // Predicated region
        $region33: #{tpu_custom_call.1} parent=31 // pred_check
          %p1200 = pneg %p103
        $region34: #{tpu_custom_call.1} parent=31 // pred_check_branch
          %1202 = sbr.rel (%p1200) target = $region36
        $region35: #{tpu_custom_call.1} parent=31 // pred_region
          %1204 = vsyncadd %s1196, 0
          %s1205 = smul.addr %s17, 12
          %s1206 = smul.addr %s1205, 4
          %s1207 = scalar_lea.hbm %s3, %s1206
          %s1208 = sshll.u32 %s1199, 4
          %s1209 = int_to_ptr.vmem [resolvable:$true] %s1208
          %s1210 = sshll.u32 %s1207, 4
          %s1211 = int_to_ptr.hbm [resolvable:$true] %s1210
          %1216 = dma.vmem_to_hbm [thread:$0]  %s1209, 768, %s1211, %s1196, 64, 64, 4
        $region36: #{tpu_custom_call.1} parent=31 // pred_fallthru
          _
      $region32: #{tpu_custom_call.1} parent=5 // pred_fallthru
        _
      %p1217 = scmp.le.s32.totalorder 2, %s12
      // Predicated region
      $region37: #{tpu_custom_call.1} parent=5 // pred_check
        %p1218 = pneg %p1217
      $region38: #{tpu_custom_call.1} parent=5 // pred_check_branch
        %1220 = sbr.rel (%p1218) target = $region40
      $region39: #{tpu_custom_call.1} parent=5 // pred_region
        %s1221 = ssub.s32 %s12, 2
        // Predicated region
        $region41: #{tpu_custom_call.1} parent=39 // pred_check
          %p1222 = pneg %p109
        $region42: #{tpu_custom_call.1} parent=39 // pred_check_branch
          %1224 = sbr.rel (%p1222) target = $region44
        $region43: #{tpu_custom_call.1} parent=39 // pred_region
          %s1225 = sand.u32 %s94, 1
          %s1226 = scalar_lea.sflag [#allocation3], %s1225
          %s1227 = sand.u32 %s94, 1
          %s1228 = smul.addr %s1227, 48
          %s1229 = scalar_lea.vmem [#allocation2], %s1228
          %1231 = dma.done %s1226, 768
        $region44: #{tpu_custom_call.1} parent=39 // pred_fallthru
          _
      $region40: #{tpu_custom_call.1} parent=5 // pred_fallthru
        _
    $region6: #{tpu_custom_call.1} parent=1 // loop_footer
      %s16 = sadd.s32 1, %s12
    $region7: #{tpu_custom_call.1} parent=1 // loop_footer_branch
      %11 = sbr.rel target = $region3
    $region8: #{tpu_custom_call.1} parent=1 // loop_exit
      _
    %1232 = vsyncpa [#allocation3], 1
    %s1233 = scalar_lea.sflag [#allocation3], 1
    %1234 = vsyncpa %s1233, 1

</llo_original>
